<compile_context>
chip_gen: v7x
topology: tpu7x:2x2x1
jax: 0.10.0
libtpu: 0.0.40
codegen_flags: <defaults>
</compile_context>

<pallas_src>
import jax
import jax.numpy as jnp
from jax.experimental import pallas as pl
from jax.experimental.pallas import tpu as pltpu

LANE = 128


def _round_up(a, b):
    return -(-a // b) * b


def _block_diag(m, p):
    """Block-diagonal of `p` copies of 2-D matrix `m` (tiny, built in wrapper)."""
    if p == 1:
        return m
    r, c = m.shape
    t = jnp.eye(p, dtype=m.dtype)[:, None, :, None] * m[None, :, None, :]
    return t.reshape(p * r, p * c)


def _vmem_capacity_bytes():
    try:
        return int(pltpu.get_tpu_info().vmem_capacity_bytes)
    except Exception:
        return 64 << 20  # conservative (v7x-sized) fallback


def _choose_tile_rows(rows, in_lanes, vmem_cap):
    """Packed rows per grid step, sized from the generation's VMEM capacity."""
    # Double-buffered input block + double-buffered output block, f32.
    bytes_per_row = 2 * 4 * (_round_up(in_lanes, LANE) + LANE)
    budget = vmem_cap // 4                      # generous headroom
    tr = max(8, budget // bytes_per_row)
    tr = min(tr, 8192)                          # ~4-8 MiB/step >> 0.35 us overhead
    if rows <= 8:
        return rows                             # single full-extent block
    # >=2 grid steps where possible so both v7x TensorCores get work,
    # and keep the block a multiple of 8 sublanes.
    tr = min(tr, _round_up(pl.cdiv(rows, 2), 8), (rows // 8) * 8)
    return max(tr, 8)


def mlp_kernel(xp_ref, w1_ref, b1_ref, w2_ref, b2_ref, w3_ref, b3_ref, o_ref):
    hp = jax.lax.Precision.HIGHEST
    xp = xp_ref[...]                                      # (TR, P*F) packed rows

    # fc1: one lane-dense MXU matmul with K = P*F (128 for F=16).
    h1 = jnp.dot(xp, w1_ref[...], precision=hp, preferred_element_type=jnp.float32)
    h1 = jnp.maximum(h1 + b1_ref[...], 0.0)               # (TR, P*5)

    # fc2 / fc3: tiny block-diagonal matmuls; fully hidden under the x DMA.
    h2 = jnp.dot(h1, w2_ref[...], precision=hp, preferred_element_type=jnp.float32)
    h2 = jnp.maximum(h2 + b2_ref[...], 0.0)               # (TR, P*3)

    z = jnp.dot(h2, w3_ref[...], precision=hp, preferred_element_type=jnp.float32)
    z = z + b3_ref[...]                                    # (TR, P)

    # sigmoid(z) == 0.5 * tanh(0.5*z) + 0.5  (tanh -> EUP slot).
    o_ref[...] = 0.5 * jnp.tanh(0.5 * z) + 0.5


def net_forward(x, params):
    """Forward pass. x: (batch, n_features) f32. Returns (batch, 1) f32."""
    w1, b1, w2, b2, w3, b3 = params
    batch, nf = x.shape

    # Packing factor: P samples side by side along the lane dim -> lane-dense tile.
    P = LANE // nf if (nf <= LANE and LANE % nf == 0) else 1

    pb = _round_up(batch, P)
    if pb != batch:
        # Only taken when batch % P != 0 (pads at most P-1 rows).
        x = jnp.pad(x, ((0, pb - batch), (0, 0)))
    rows = pb // P
    xp = x.reshape(rows, P * nf)   # row-major reshape, no transpose

    # Block-diagonal expanded weights / tiled biases (tiny, torch (out,in) source).
    w1e = _block_diag(w1.T, P)          # (P*nf, P*5)
    w2e = _block_diag(w2.T, P)          # (P*5,  P*3)
    w3e = _block_diag(w3.T, P)          # (P*3,  P*1)
    b1e = jnp.tile(b1, P)[None, :]      # (1, P*5)
    b2e = jnp.tile(b2, P)[None, :]      # (1, P*3)
    b3e = jnp.tile(b3, P)[None, :]      # (1, P*1)

    vmem_cap = _vmem_capacity_bytes()
    tr = _choose_tile_rows(rows, P * nf, vmem_cap)
    grid = (pl.cdiv(rows, tr),)         # ragged last block handled by Pallas

    def resident(a):
        # Same block every grid step -> stays VMEM-resident (no re-DMA).
        return pl.BlockSpec(a.shape, lambda i: (0, 0))

    out = pl.pallas_call(
        mlp_kernel,
        out_shape=jax.ShapeDtypeStruct((rows, P), jnp.float32),
        grid=grid,
        in_specs=[
            pl.BlockSpec((tr, P * nf), lambda i: (i, 0)),   # x: streamed, lane-dense
            resident(w1e), resident(b1e),
            resident(w2e), resident(b2e),
            resident(w3e), resident(b3e),
        ],
        out_specs=pl.BlockSpec((tr, P), lambda i: (i, 0)),
        compiler_params=pltpu.CompilerParams(
            dimension_semantics=("parallel",),               # megacore on v7x
            vmem_limit_bytes=int(vmem_cap * 3 // 4),         # 96 MiB v5e/v6e, 48 MiB v7x
        ),
    )(xp, w1e, b1e, w2e, b2e, w3e, b3e)

    # (rows, P) -> (batch, 1): pure row-major reshape (no transpose pass).
    return out.reshape(pb, 1)[:batch]


def init_params(key, n_features):
    """nn.Linear-style init (uniform +/- 1/sqrt(fan_in)), torch (out, in) layout."""
    keys = jax.random.split(key, 6)

    def linear(kw, kb, fan_in, fan_out):
        bound = 1.0 / jnp.sqrt(jnp.float32(fan_in))
        w = jax.random.uniform(kw, (fan_out, fan_in), jnp.float32, -bound, bound)
        b = jax.random.uniform(kb, (fan_out,), jnp.float32, -bound, bound)
        return w, b

    w1, b1 = linear(keys[0], keys[1], n_features, 5)
    w2, b2 = linear(keys[2], keys[3], 5, 3)
    w3, b3 = linear(keys[4], keys[5], 3, 1)
    return (w1, b1, w2, b2, w3, b3)


if __name__ == "__main__":
    key = jax.random.PRNGKey(0)
    k_x, k_p = jax.random.split(key)

    # Small demo; batch=1000 exercises the ragged (non-divisible) grid path.
    batch, n_features = 1000, 16
    x = jax.random.normal(k_x, (batch, n_features), jnp.float32)
    params = init_params(k_p, n_features)

    out = jax.block_until_ready(net_forward(x, params))

    # Plain-JAX reference (torch semantics: y = x @ W.T + b).
    w1, b1, w2, b2, w3, b3 = params
    hp = jax.lax.Precision.HIGHEST
    ref = jnp.maximum(jnp.dot(x, w1.T, precision=hp) + b1, 0.0)
    ref = jnp.maximum(jnp.dot(ref, w2.T, precision=hp) + b2, 0.0)
    ref = jax.nn.sigmoid(jnp.dot(ref, w3.T, precision=hp) + b3)
    ref = ref.reshape(batch, 1)

    assert out.shape == (batch, 1)
    assert jnp.allclose(out, ref, atol=1e-4, rtol=1e-4)

    print("KERNEL_OK")
</pallas_src>

<mosaic_0001>
module attributes {stable_mosaic.version = 11 : i64} {
  func.func @mlp_kernel(%arg0: i32, %arg1: memref<64x128xf32, #tpu.memory_space<vmem>>, %arg2: memref<128x40xf32, #tpu.memory_space<vmem>>, %arg3: memref<1x40xf32, #tpu.memory_space<vmem>>, %arg4: memref<40x24xf32, #tpu.memory_space<vmem>>, %arg5: memref<1x24xf32, #tpu.memory_space<vmem>>, %arg6: memref<24x8xf32, #tpu.memory_space<vmem>>, %arg7: memref<1x8xf32, #tpu.memory_space<vmem>>, %arg8: memref<64x8xf32, #tpu.memory_space<vmem>>) attributes {dimension_semantics = [#tpu.dimension_semantics<parallel>], iteration_bounds = array<i64: 2>, scalar_prefetch = 0 : i64, scratch_operands = 0 : i64, tpu.core_type = #tpu.core_type<tc>, window_params = [{transform_indices = @transform_0, window_bounds = array<i64: 64, 128>}, {pipeline_mode = #tpu.pipeline_mode<synchronous>, transform_indices = @transform_1, window_bounds = array<i64: 128, 40>}, {pipeline_mode = #tpu.pipeline_mode<synchronous>, transform_indices = @transform_2, window_bounds = array<i64: 1, 40>}, {pipeline_mode = #tpu.pipeline_mode<synchronous>, transform_indices = @transform_3, window_bounds = array<i64: 40, 24>}, {pipeline_mode = #tpu.pipeline_mode<synchronous>, transform_indices = @transform_4, window_bounds = array<i64: 1, 24>}, {pipeline_mode = #tpu.pipeline_mode<synchronous>, transform_indices = @transform_5, window_bounds = array<i64: 24, 8>}, {pipeline_mode = #tpu.pipeline_mode<synchronous>, transform_indices = @transform_6, window_bounds = array<i64: 1, 8>}, {transform_indices = @transform_7, window_bounds = array<i64: 64, 8>}]} {
    %c0 = arith.constant 0 : index
    %c0_0 = arith.constant 0 : index
    %0 = vector.load %arg1[%c0, %c0_0] : memref<64x128xf32, #tpu.memory_space<vmem>>, vector<64x128xf32>
    %c0_1 = arith.constant 0 : index
    %c0_2 = arith.constant 0 : index
    %1 = vector.load %arg2[%c0_1, %c0_2] : memref<128x40xf32, #tpu.memory_space<vmem>>, vector<128x40xf32>
    %cst = arith.constant dense<0.000000e+00> : vector<64x40xf32>
    %2 = tpu.matmul %0, %1, %cst {dimension_numbers = #tpu.dot_dimension_numbers<[1], [0], [0], [1], [0, 0, 1, 1], [], []>, precision = #tpu.contract_precision<fp32>} : vector<64x128xf32>, vector<128x40xf32>, vector<64x40xf32> -> vector<64x40xf32>
    %c0_3 = arith.constant 0 : index
    %c0_4 = arith.constant 0 : index
    %3 = vector.load %arg3[%c0_3, %c0_4] : memref<1x40xf32, #tpu.memory_space<vmem>>, vector<1x40xf32>
    %4 = vector.broadcast %3 : vector<1x40xf32> to vector<64x40xf32>
    %5 = arith.addf %2, %4 : vector<64x40xf32>
    %cst_5 = arith.constant 0.000000e+00 : f32
    %6 = vector.broadcast %cst_5 : f32 to vector<64x40xf32>
    %7 = arith.maximumf %5, %6 : vector<64x40xf32>
    %c0_6 = arith.constant 0 : index
    %c0_7 = arith.constant 0 : index
    %8 = vector.load %arg4[%c0_6, %c0_7] : memref<40x24xf32, #tpu.memory_space<vmem>>, vector<40x24xf32>
    %cst_8 = arith.constant dense<0.000000e+00> : vector<64x24xf32>
    %9 = tpu.matmul %7, %8, %cst_8 {dimension_numbers = #tpu.dot_dimension_numbers<[1], [0], [0], [1], [0, 0, 1, 1], [], []>, precision = #tpu.contract_precision<fp32>} : vector<64x40xf32>, vector<40x24xf32>, vector<64x24xf32> -> vector<64x24xf32>
    %c0_9 = arith.constant 0 : index
    %c0_10 = arith.constant 0 : index
    %10 = vector.load %arg5[%c0_9, %c0_10] : memref<1x24xf32, #tpu.memory_space<vmem>>, vector<1x24xf32>
    %11 = vector.broadcast %10 : vector<1x24xf32> to vector<64x24xf32>
    %12 = arith.addf %9, %11 : vector<64x24xf32>
    %cst_11 = arith.constant 0.000000e+00 : f32
    %13 = vector.broadcast %cst_11 : f32 to vector<64x24xf32>
    %14 = arith.maximumf %12, %13 : vector<64x24xf32>
    %c0_12 = arith.constant 0 : index
    %c0_13 = arith.constant 0 : index
    %15 = vector.load %arg6[%c0_12, %c0_13] : memref<24x8xf32, #tpu.memory_space<vmem>>, vector<24x8xf32>
    %cst_14 = arith.constant dense<0.000000e+00> : vector<64x8xf32>
    %16 = tpu.matmul %14, %15, %cst_14 {dimension_numbers = #tpu.dot_dimension_numbers<[1], [0], [0], [1], [0, 0, 1, 1], [], []>, precision = #tpu.contract_precision<fp32>} : vector<64x24xf32>, vector<24x8xf32>, vector<64x8xf32> -> vector<64x8xf32>
    %c0_15 = arith.constant 0 : index
    %c0_16 = arith.constant 0 : index
    %17 = vector.load %arg7[%c0_15, %c0_16] : memref<1x8xf32, #tpu.memory_space<vmem>>, vector<1x8xf32>
    %18 = vector.broadcast %17 : vector<1x8xf32> to vector<64x8xf32>
    %19 = arith.addf %16, %18 : vector<64x8xf32>
    %cst_17 = arith.constant 5.000000e-01 : f32
    %20 = vector.broadcast %cst_17 : f32 to vector<64x8xf32>
    %21 = arith.mulf %20, %19 : vector<64x8xf32>
    %22 = math.tanh %21 : vector<64x8xf32>
    %cst_18 = arith.constant 5.000000e-01 : f32
    %23 = vector.broadcast %cst_18 : f32 to vector<64x8xf32>
    %24 = arith.mulf %23, %22 : vector<64x8xf32>
    %cst_19 = arith.constant 5.000000e-01 : f32
    %25 = vector.broadcast %cst_19 : f32 to vector<64x8xf32>
    %26 = arith.addf %24, %25 : vector<64x8xf32>
    %c0_20 = arith.constant 0 : index
    %c0_21 = arith.constant 0 : index
    %27 = vector.load %arg8[%c0_20, %c0_21] : memref<64x8xf32, #tpu.memory_space<vmem>>, vector<64x8xf32>
    tpu.vector_store %arg8[%c0_20, %c0_21], %26 {strides = array<i32>} : memref<64x8xf32, #tpu.memory_space<vmem>>, vector<64x8xf32>,
    return
  }
  func.func @transform_0(%arg0: i32) -> (i32, i32) {
    %c0_i32 = arith.constant 0 : i32
    %c0_i32_0 = arith.constant 0 : i32
    return %arg0, %c0_i32 : i32, i32
  }
  func.func @transform_1(%arg0: i32) -> (i32, i32) {
    %c0_i32 = arith.constant 0 : i32
    %c0_i32_0 = arith.constant 0 : i32
    %c0_i32_1 = arith.constant 0 : i32
    return %c0_i32, %c0_i32_0 : i32, i32
  }
  func.func @transform_2(%arg0: i32) -> (i32, i32) {
    %c0_i32 = arith.constant 0 : i32
    %c0_i32_0 = arith.constant 0 : i32
    %c0_i32_1 = arith.constant 0 : i32
    return %c0_i32, %c0_i32_0 : i32, i32
  }
  func.func @transform_3(%arg0: i32) -> (i32, i32) {
    %c0_i32 = arith.constant 0 : i32
    %c0_i32_0 = arith.constant 0 : i32
    %c0_i32_1 = arith.constant 0 : i32
    return %c0_i32, %c0_i32_0 : i32, i32
  }
  func.func @transform_4(%arg0: i32) -> (i32, i32) {
    %c0_i32 = arith.constant 0 : i32
    %c0_i32_0 = arith.constant 0 : i32
    %c0_i32_1 = arith.constant 0 : i32
    return %c0_i32, %c0_i32_0 : i32, i32
  }
  func.func @transform_5(%arg0: i32) -> (i32, i32) {
    %c0_i32 = arith.constant 0 : i32
    %c0_i32_0 = arith.constant 0 : i32
    %c0_i32_1 = arith.constant 0 : i32
    return %c0_i32, %c0_i32_0 : i32, i32
  }
  func.func @transform_6(%arg0: i32) -> (i32, i32) {
    %c0_i32 = arith.constant 0 : i32
    %c0_i32_0 = arith.constant 0 : i32
    %c0_i32_1 = arith.constant 0 : i32
    return %c0_i32, %c0_i32_0 : i32, i32
  }
  func.func @transform_7(%arg0: i32) -> (i32, i32) {
    %c0_i32 = arith.constant 0 : i32
    %c0_i32_0 = arith.constant 0 : i32
    return %arg0, %c0_i32 : i32, i32
  }
}

</mosaic_0001>

<llo_original>
// kernel: tpu_custom_call.1
$region0: #{tpu_custom_call.1}
  #allocation0 [shape = 'u32[]', space=smem, size = 0x4, offset = 0x4, fixed_abs, tag = 'smem constant byte address 0x4 - core index']
  #allocation1 [shape = 'u32[144,128]{1,0:T(1,128)}', space=vmem, size = 0x12000, scoped, tag = 'internal scratch']
  %s0 = inlined_call_operand.vmem [shape: f32[125,128], index: 0, kind: input, shape index: {}]
  %s1 = inlined_call_operand.vmem [shape: f32[128,40], index: 1, kind: input, shape index: {}]
  %s2 = inlined_call_operand.vmem [shape: f32[1,40], index: 2, kind: input, shape index: {}]
  %s3 = inlined_call_operand.vmem [shape: f32[40,24], index: 3, kind: input, shape index: {}]
  %s4 = inlined_call_operand.vmem [shape: f32[1,24], index: 4, kind: input, shape index: {}]
  %s5 = inlined_call_operand.vmem [shape: f32[24,8], index: 5, kind: input, shape index: {}]
  %s6 = inlined_call_operand.vmem [shape: f32[1,8], index: 6, kind: input, shape index: {}]
  %s7 = inlined_call_operand.vmem [shape: f32[125,8], index: 7, kind: output, shape index: {}]
  %s8 = sld [smem:[#allocation0]]
  $region61: #{tpu_custom_call.1} parent=0
    _
  %s10 = ssub.s32 1, %s8
  %s11 = scalar_select 0, %s10, %s8
  loop: start=0, step=1, limit=4
  $region2: #{tpu_custom_call.1} parent=0 // loop_pre_header
    _
  $region3: #{tpu_custom_call.1} parent=0 // loop_header
    %s13 = sphi 0, %s17
    %p14 = scmp.ge.s32.totalorder %s13, 4
    %s23 = sphi 0, %s25
    %s26 = sphi 0, %s23
    %s27 = sphi 0, %s26
    %s43 = sphi 0, %s27
    %s47 = sphi 0, %s47
    %s49 = sphi 0, %s47
    %s50 = sphi 0, %s49
    %s64 = sphi 0, %s50
    %s68 = sphi 0, %s68
    %s70 = sphi 0, %s68
    %s71 = sphi 0, %s70
    %s85 = sphi 0, %s71
    %s89 = sphi 0, %s89
    %s91 = sphi 0, %s89
    %s92 = sphi 0, %s91
    %s106 = sphi 0, %s92
    %s110 = sphi 0, %s110
    %s112 = sphi 0, %s110
    %s113 = sphi 0, %s112
    %s127 = sphi 0, %s113
    %s131 = sphi 0, %s131
    %s133 = sphi 0, %s131
    %s134 = sphi 0, %s133
    %s148 = sphi 0, %s134
    %s152 = sphi 0, %s152
    %s154 = sphi 0, %s152
    %s155 = sphi 0, %s154
    %s169 = sphi 0, %s155
    %s175 = sphi 0, %s177
    %s178 = sphi 0, %s175
    %s179 = sphi 0, %s178
    %s195 = sphi 0, %s179
  $region4: #{tpu_custom_call.1} parent=0 // loop_header_branch
    %16 = sbr.rel (%p14) target = $region8
  $region5: #{tpu_custom_call.1} parent=0 // loop_body
    %s18 = ssub.s32 %s13, 1
    %s19 = ssub.s32 %s13, 2
    %s20 = sadd.s32 %s13, 1
    %s21 = ssub.s32 %s13, %s20
    %p22 = scmp.eq.s32.totalorder %s21, 0
    %s24 = sadd.s32 %s23, 1
    %s25 = scalar_select %p22, %s23, %s24
    %p28 = pneg %p22
    %p29 = scmp.eq.s32.totalorder %s13, 1
    %p30 = por %p28, %p29
    %p31 = scmp.ne.s32.totalorder %s23, %s26
    %p32 = scmp.eq.s32.totalorder %s13, 0
    %p33 = por %p31, %p32
    %p34 = scmp.ne.s32.totalorder %s23, %s26
    %p35 = scmp.eq.s32.totalorder %s18, 1
    %p36 = por %p34, %p35
    %p37 = scmp.ne.s32.totalorder %s26, %s27
    %p38 = scmp.eq.s32.totalorder %s18, 0
    %p39 = por %p37, %p38
    %p40 = scmp.ne.s32.totalorder %s26, %s27
    %p41 = scmp.eq.s32.totalorder %s19, 1
    %p42 = por %p40, %p41
    %p44 = scmp.ne.s32.totalorder %s27, %s43
    %p45 = scmp.eq.s32.totalorder %s19, 0
    %p46 = por %p44, %p45
    %s48 = sadd.s32 %s47, 1
    %p51 = scmp.eq.s32.totalorder %s13, 1
    %p52 = scmp.ne.s32.totalorder %s47, %s49
    %p53 = scmp.eq.s32.totalorder %s13, 0
    %p54 = por %p52, %p53
    %p55 = scmp.ne.s32.totalorder %s47, %s49
    %p56 = scmp.eq.s32.totalorder %s18, 1
    %p57 = por %p55, %p56
    %p58 = scmp.ne.s32.totalorder %s49, %s50
    %p59 = scmp.eq.s32.totalorder %s18, 0
    %p60 = por %p58, %p59
    %p61 = scmp.ne.s32.totalorder %s49, %s50
    %p62 = scmp.eq.s32.totalorder %s19, 1
    %p63 = por %p61, %p62
    %p65 = scmp.ne.s32.totalorder %s50, %s64
    %p66 = scmp.eq.s32.totalorder %s19, 0
    %p67 = por %p65, %p66
    %s69 = sadd.s32 %s68, 1
    %p72 = scmp.eq.s32.totalorder %s13, 1
    %p73 = scmp.ne.s32.totalorder %s68, %s70
    %p74 = scmp.eq.s32.totalorder %s13, 0
    %p75 = por %p73, %p74
    %p76 = scmp.ne.s32.totalorder %s68, %s70
    %p77 = scmp.eq.s32.totalorder %s18, 1
    %p78 = por %p76, %p77
    %p79 = scmp.ne.s32.totalorder %s70, %s71
    %p80 = scmp.eq.s32.totalorder %s18, 0
    %p81 = por %p79, %p80
    %p82 = scmp.ne.s32.totalorder %s70, %s71
    %p83 = scmp.eq.s32.totalorder %s19, 1
    %p84 = por %p82, %p83
    %p86 = scmp.ne.s32.totalorder %s71, %s85
    %p87 = scmp.eq.s32.totalorder %s19, 0
    %p88 = por %p86, %p87
    %s90 = sadd.s32 %s89, 1
    %p93 = scmp.eq.s32.totalorder %s13, 1
    %p94 = scmp.ne.s32.totalorder %s89, %s91
    %p95 = scmp.eq.s32.totalorder %s13, 0
    %p96 = por %p94, %p95
    %p97 = scmp.ne.s32.totalorder %s89, %s91
    %p98 = scmp.eq.s32.totalorder %s18, 1
    %p99 = por %p97, %p98
    %p100 = scmp.ne.s32.totalorder %s91, %s92
    %p101 = scmp.eq.s32.totalorder %s18, 0
    %p102 = por %p100, %p101
    %p103 = scmp.ne.s32.totalorder %s91, %s92
    %p104 = scmp.eq.s32.totalorder %s19, 1
    %p105 = por %p103, %p104
    %p107 = scmp.ne.s32.totalorder %s92, %s106
    %p108 = scmp.eq.s32.totalorder %s19, 0
    %p109 = por %p107, %p108
    %s111 = sadd.s32 %s110, 1
    %p114 = scmp.eq.s32.totalorder %s13, 1
    %p115 = scmp.ne.s32.totalorder %s110, %s112
    %p116 = scmp.eq.s32.totalorder %s13, 0
    %p117 = por %p115, %p116
    %p118 = scmp.ne.s32.totalorder %s110, %s112
    %p119 = scmp.eq.s32.totalorder %s18, 1
    %p120 = por %p118, %p119
    %p121 = scmp.ne.s32.totalorder %s112, %s113
    %p122 = scmp.eq.s32.totalorder %s18, 0
    %p123 = por %p121, %p122
    %p124 = scmp.ne.s32.totalorder %s112, %s113
    %p125 = scmp.eq.s32.totalorder %s19, 1
    %p126 = por %p124, %p125
    %p128 = scmp.ne.s32.totalorder %s113, %s127
    %p129 = scmp.eq.s32.totalorder %s19, 0
    %p130 = por %p128, %p129
    %s132 = sadd.s32 %s131, 1
    %p135 = scmp.eq.s32.totalorder %s13, 1
    %p136 = scmp.ne.s32.totalorder %s131, %s133
    %p137 = scmp.eq.s32.totalorder %s13, 0
    %p138 = por %p136, %p137
    %p139 = scmp.ne.s32.totalorder %s131, %s133
    %p140 = scmp.eq.s32.totalorder %s18, 1
    %p141 = por %p139, %p140
    %p142 = scmp.ne.s32.totalorder %s133, %s134
    %p143 = scmp.eq.s32.totalorder %s18, 0
    %p144 = por %p142, %p143
    %p145 = scmp.ne.s32.totalorder %s133, %s134
    %p146 = scmp.eq.s32.totalorder %s19, 1
    %p147 = por %p145, %p146
    %p149 = scmp.ne.s32.totalorder %s134, %s148
    %p150 = scmp.eq.s32.totalorder %s19, 0
    %p151 = por %p149, %p150
    %s153 = sadd.s32 %s152, 1
    %p156 = scmp.eq.s32.totalorder %s13, 1
    %p157 = scmp.ne.s32.totalorder %s152, %s154
    %p158 = scmp.eq.s32.totalorder %s13, 0
    %p159 = por %p157, %p158
    %p160 = scmp.ne.s32.totalorder %s152, %s154
    %p161 = scmp.eq.s32.totalorder %s18, 1
    %p162 = por %p160, %p161
    %p163 = scmp.ne.s32.totalorder %s154, %s155
    %p164 = scmp.eq.s32.totalorder %s18, 0
    %p165 = por %p163, %p164
    %p166 = scmp.ne.s32.totalorder %s154, %s155
    %p167 = scmp.eq.s32.totalorder %s19, 1
    %p168 = por %p166, %p167
    %p170 = scmp.ne.s32.totalorder %s155, %s169
    %p171 = scmp.eq.s32.totalorder %s19, 0
    %p172 = por %p170, %p171
    %s173 = ssub.s32 %s13, %s20
    %p174 = scmp.eq.s32.totalorder %s173, 0
    %s176 = sadd.s32 %s175, 1
    %s177 = scalar_select %p174, %s175, %s176
    %p180 = pneg %p174
    %p181 = scmp.eq.s32.totalorder %s13, 1
    %p182 = por %p180, %p181
    %p183 = scmp.ne.s32.totalorder %s175, %s178
    %p184 = scmp.eq.s32.totalorder %s13, 0
    %p185 = por %p183, %p184
    %p186 = scmp.ne.s32.totalorder %s175, %s178
    %p187 = scmp.eq.s32.totalorder %s18, 1
    %p188 = por %p186, %p187
    %p189 = scmp.ne.s32.totalorder %s178, %s179
    %p190 = scmp.eq.s32.totalorder %s18, 0
    %p191 = por %p189, %p190
    %p192 = scmp.ne.s32.totalorder %s178, %s179
    %p193 = scmp.eq.s32.totalorder %s19, 1
    %p194 = por %p192, %p193
    %p196 = scmp.ne.s32.totalorder %s179, %s195
    %p197 = scmp.eq.s32.totalorder %s19, 0
    %p198 = por %p196, %p197
    %p199 = scmp.le.s32.totalorder 1, %s13
    %p200 = scmp.lt.s32.totalorder %s13, 3
    %p201 = pnand %p199, %p200
    %p202 = pneg %p201
    // Predicated region
    $region9: #{tpu_custom_call.1} parent=5 // pred_check
      _
    $region10: #{tpu_custom_call.1} parent=5 // pred_check_branch
      %204 = sbr.rel (%p201) target = $region12
    $region11: #{tpu_custom_call.1} parent=5 // pred_region
      %s205 = ssub.s32 %s13, 1
      // Predicated region
      $region13: #{tpu_custom_call.1} parent=11 // pred_check
        %p206 = pneg %p60
      $region14: #{tpu_custom_call.1} parent=11 // pred_check_branch
        %208 = sbr.rel (%p206) target = $region16
      $region15: #{tpu_custom_call.1} parent=11 // pred_region
        _
      $region16: #{tpu_custom_call.1} parent=11 // pred_fallthru
        _
      // Predicated region
      $region17: #{tpu_custom_call.1} parent=11 // pred_check
        %p209 = pneg %p81
      $region18: #{tpu_custom_call.1} parent=11 // pred_check_branch
        %211 = sbr.rel (%p209) target = $region20
      $region19: #{tpu_custom_call.1} parent=11 // pred_region
        _
      $region20: #{tpu_custom_call.1} parent=11 // pred_fallthru
        _
      // Predicated region
      $region21: #{tpu_custom_call.1} parent=11 // pred_check
        %p212 = pneg %p102
      $region22: #{tpu_custom_call.1} parent=11 // pred_check_branch
        %214 = sbr.rel (%p212) target = $region24
      $region23: #{tpu_custom_call.1} parent=11 // pred_region
        _
      $region24: #{tpu_custom_call.1} parent=11 // pred_fallthru
        _
      // Predicated region
      $region25: #{tpu_custom_call.1} parent=11 // pred_check
        %p215 = pneg %p123
      $region26: #{tpu_custom_call.1} parent=11 // pred_check_branch
        %217 = sbr.rel (%p215) target = $region28
      $region27: #{tpu_custom_call.1} parent=11 // pred_region
        _
      $region28: #{tpu_custom_call.1} parent=11 // pred_fallthru
        _
      // Predicated region
      $region29: #{tpu_custom_call.1} parent=11 // pred_check
        %p218 = pneg %p144
      $region30: #{tpu_custom_call.1} parent=11 // pred_check_branch
        %220 = sbr.rel (%p218) target = $region32
      $region31: #{tpu_custom_call.1} parent=11 // pred_region
        _
      $region32: #{tpu_custom_call.1} parent=11 // pred_fallthru
        _
      // Predicated region
      $region33: #{tpu_custom_call.1} parent=11 // pred_check
        %p221 = pneg %p165
      $region34: #{tpu_custom_call.1} parent=11 // pred_check_branch
        %223 = sbr.rel (%p221) target = $region36
      $region35: #{tpu_custom_call.1} parent=11 // pred_region
        _
      $region36: #{tpu_custom_call.1} parent=11 // pred_fallthru
        _
    $region12: #{tpu_custom_call.1} parent=5 // pred_fallthru
      _
    %p224 = scmp.lt.s32.totalorder %s13, 2
    // Predicated region
    $region37: #{tpu_custom_call.1} parent=5 // pred_check
      %p225 = pneg %p224
    $region38: #{tpu_custom_call.1} parent=5 // pred_check_branch
      %227 = sbr.rel (%p225) target = $region40
    $region39: #{tpu_custom_call.1} parent=5 // pred_region
      // Predicated region
      $region41: #{tpu_custom_call.1} parent=39 // pred_check
        %p228 = pneg %p33
      $region42: #{tpu_custom_call.1} parent=39 // pred_check_branch
        %230 = sbr.rel (%p228) target = $region44
      $region43: #{tpu_custom_call.1} parent=39 // pred_region
        %s231 = smul.u32 8, %s13
        %p232 = scmp.lt.s32.totalorder %s231, 15
        %s233 = scalar_select %p232, %s231, 15
        %s234 = smul.addr %s233, 8
        %s235 = scalar_lea.vmem %s0, %s234
        %s236 = smul.u32 8, %s13
      $region44: #{tpu_custom_call.1} parent=39 // pred_fallthru
        _
    $region40: #{tpu_custom_call.1} parent=5 // pred_fallthru
      _
    %p237 = scmp.le.s32.totalorder 1, %s13
    %p238 = scmp.lt.s32.totalorder %s13, 3
    %p239 = pnand %p237, %p238
    %p240 = pneg %p239
    // Predicated region
    $region45: #{tpu_custom_call.1} parent=5 // pred_check
      _
    $region46: #{tpu_custom_call.1} parent=5 // pred_check_branch
      %242 = sbr.rel (%p239) target = $region48
    $region47: #{tpu_custom_call.1} parent=5 // pred_region
      %s243 = ssub.s32 %s13, 1
      %s244 = smul.u32 8, %s18
      %p245 = scmp.lt.s32.totalorder %s244, 15
      %s246 = scalar_select %p245, %s244, 15
      %s247 = smul.addr %s246, 8
      %s248 = scalar_lea.vmem %s0, %s247
      %p249 = pneg %p39
      %p250 = pneg %p36
      %p251 = pneg %p60
      %p252 = pneg %p57
      %p253 = pneg %p81
      %p254 = pneg %p78
      %p255 = pneg %p102
      %p256 = pneg %p99
      %p257 = pneg %p123
      %p258 = pneg %p120
      %p259 = pneg %p144
      %p260 = pneg %p141
      %p261 = pneg %p165
      %p262 = pneg %p162
      %p263 = pneg %p191
      %p264 = pneg %p188
      %s265 = smul.u32 8, %s18
      %p266 = scmp.lt.s32.totalorder %s265, 15
      %s267 = scalar_select %p266, %s265, 15
      %s268 = smul.addr %s267, 8
      %s269 = scalar_lea.vmem %s7, %s268
      %s270 = smul.u32 8, %s18
      %p271 = scmp.lt.s32.totalorder %s270, 15
      %s272 = scalar_select %p271, %s270, 15
      %s273 = smul.addr %s272, 8
      %s274 = scalar_lea.vmem %s0, %s273
      %s275 = smul.u32 8, %s18
      %s276 = smul.u32 8, %s18
      %p277 = scmp.lt.s32.totalorder %s276, 15
      %s278 = scalar_select %p277, %s276, 15
      %s279 = smul.addr %s278, 8
      %s280 = scalar_lea.vmem %s7, %s279
      %s281 = smul.u32 8, %s18
      %v282 = vld [vmem:[%s274] sm:$0xff]
      %v283 = vld [vmem:[%s274 + $0x8] sm:$0xff]
      %v284 = vld [vmem:[%s274 + $0x10] sm:$0xff]
      %v285 = vld [vmem:[%s274 + $0x18] sm:$0xff]
      %v286 = vld [vmem:[%s274 + $0x20] sm:$0xff]
      %v287 = vld [vmem:[%s274 + $0x28] sm:$0xff]
      %v288 = vld [vmem:[%s274 + $0x30] sm:$0xff]
      %v289 = vld [vmem:[%s274 + $0x38] sm:$0xff]
      %v290 = vld [vmem:[%s1] sm:$0xff]
      %v291 = vld [vmem:[%s1 + $0x8] sm:$0xff]
      %v292 = vld [vmem:[%s1 + $0x10] sm:$0xff]
      %v293 = vld [vmem:[%s1 + $0x18] sm:$0xff]
      %v294 = vld [vmem:[%s1 + $0x20] sm:$0xff]
      %v295 = vld [vmem:[%s1 + $0x28] sm:$0xff]
      %v296 = vld [vmem:[%s1 + $0x30] sm:$0xff]
      %v297 = vld [vmem:[%s1 + $0x38] sm:$0xff]
      %v298 = vld [vmem:[%s1 + $0x40] sm:$0xff]
      %v299 = vld [vmem:[%s1 + $0x48] sm:$0xff]
      %v300 = vld [vmem:[%s1 + $0x50] sm:$0xff]
      %v301 = vld [vmem:[%s1 + $0x58] sm:$0xff]
      %v302 = vld [vmem:[%s1 + $0x60] sm:$0xff]
      %v303 = vld [vmem:[%s1 + $0x68] sm:$0xff]
      %v304 = vld [vmem:[%s1 + $0x70] sm:$0xff]
      %v305 = vld [vmem:[%s1 + $0x78] sm:$0xff]
      %v306 = vld [vmem:[%s2] sm:$0x1]
      %v308 = vlaneseq
      %v309 = vshrl.u32 %v308, 7
      %v310 = vsub.s32 0, %v309
      %v311 = vrot.slane %v306, %v310
      %313 = vmatprep.subr.mxu0 0.0
      %v314 = vand.u32 %v290, 4294901760
      %315 = vmatpush1.msra.mxu0 %v314
      %316 = vmatprep.subr.mxu0 0.0
      %v317 = vand.u32 %v291, 4294901760
      %318 = vmatpush1.msra.mxu0 %v317
      %319 = vmatprep.subr.mxu0 0.0
      %v320 = vand.u32 %v292, 4294901760
      %321 = vmatpush1.msra.mxu0 %v320
      %322 = vmatprep.subr.mxu0 0.0
      %v323 = vand.u32 %v293, 4294901760
      %324 = vmatpush1.msra.mxu0 %v323
      %325 = vmatprep.subr.mxu0 0.0
      %v326 = vand.u32 %v294, 4294901760
      %327 = vmatpush1.msra.mxu0 %v326
      %328 = vmatprep.subr.mxu0 0.0
      %v329 = vand.u32 %v295, 4294901760
      %330 = vmatpush1.msra.mxu0 %v329
      %331 = vmatprep.subr.mxu0 0.0
      %v332 = vand.u32 %v296, 4294901760
      %333 = vmatpush1.msra.mxu0 %v332
      %334 = vmatprep.subr.mxu0 0.0
      %v335 = vand.u32 %v297, 4294901760
      %336 = vmatpush1.msra.mxu0 %v335
      %337 = vmatprep.subr.mxu0 0.0
      %v338 = vand.u32 %v298, 4294901760
      %339 = vmatpush1.msra.mxu0 %v338
      %340 = vmatprep.subr.mxu0 0.0
      %v341 = vand.u32 %v299, 4294901760
      %342 = vmatpush1.msra.mxu0 %v341
      %343 = vmatprep.subr.mxu0 0.0
      %v344 = vand.u32 %v300, 4294901760
      %345 = vmatpush1.msra.mxu0 %v344
      %346 = vmatprep.subr.mxu0 0.0
      %v347 = vand.u32 %v301, 4294901760
      %348 = vmatpush1.msra.mxu0 %v347
      %349 = vmatprep.subr.mxu0 0.0
      %v350 = vand.u32 %v302, 4294901760
      %351 = vmatpush1.msra.mxu0 %v350
      %352 = vmatprep.subr.mxu0 0.0
      %v353 = vand.u32 %v303, 4294901760
      %354 = vmatpush1.msra.mxu0 %v353
      %355 = vmatprep.subr.mxu0 0.0
      %v356 = vand.u32 %v304, 4294901760
      %357 = vmatpush1.msra.mxu0 %v356
      %358 = vmatprep.subr.mxu0 0.0
      %v359 = vand.u32 %v305, 4294901760
      %360 = vmatpush1.msra.mxu0 %v359
      %361 = vmatprep.subr.mxu0 0.0
      %362 = vmatpush1.msra.mxu0 0.0
      %363 = vmatprep.subr.mxu0 0.0
      %364 = vmatpush1.msra.mxu0 0.0
      %365 = vmatprep.subr.mxu0 0.0
      %366 = vmatpush1.msra.mxu0 0.0
      %367 = vmatprep.subr.mxu0 0.0
      %368 = vmatpush1.msra.mxu0 0.0
      %369 = vmatprep.subr.mxu0 0.0
      %370 = vmatpush1.msra.mxu0 0.0
      %371 = vmatprep.subr.mxu0 0.0
      %372 = vmatpush1.msra.mxu0 0.0
      %373 = vmatprep.subr.mxu0 0.0
      %374 = vmatpush1.msra.mxu0 0.0
      %375 = vmatprep.subr.mxu0 0.0
      %376 = vmatpush1.msra.mxu0 0.0
      %377 = vmatprep.subr.mxu0 0.0
      %378 = vmatpush1.msra.mxu0 0.0
      %379 = vmatprep.subr.mxu0 0.0
      %380 = vmatpush1.msra.mxu0 0.0
      %381 = vmatprep.subr.mxu0 0.0
      %382 = vmatpush1.msra.mxu0 0.0
      %383 = vmatprep.subr.mxu0 0.0
      %384 = vmatpush1.msra.mxu0 0.0
      %385 = vmatprep.subr.mxu0 0.0
      %386 = vmatpush1.msra.mxu0 0.0
      %387 = vmatprep.subr.mxu0 0.0
      %388 = vmatpush1.msra.mxu0 0.0
      %389 = vmatprep.subr.mxu0 0.0
      %390 = vmatpush1.msra.mxu0 0.0
      %391 = vmatprep.subr.mxu0 0.0
      %392 = vmatpush1.msra.mxu0 0.0
      %393 = vmatprep.mubr.f32.mxu0 0.0
      %v394 = vand.u32 %v282, 4294901760
      %v395 = vsub.f32 %v282, %v394
      %v396 = vand.u32 %v395, 4294901760
      %v397 = vsub.f32 %v395, %v396
      %v398 = vand.u32 %v397, 4294901760
      %399 = vmatmul.mubr.f32.gmra.mrb[0].mxu0 %v398
      %v400 = vpop.f32.mrb[0].mxu0
      %v401 = vadd.f32 %v311, %v400
      %v402 = vpop.f32.mrb[0].mxu0
      %403 = vmatprep.mubr.f32.mxu0 0.0
      %v404 = vand.u32 %v283, 4294901760
      %v405 = vsub.f32 %v283, %v404
      %v406 = vand.u32 %v405, 4294901760
      %v407 = vsub.f32 %v405, %v406
      %v408 = vand.u32 %v407, 4294901760
      %409 = vmatmul.mubr.f32.gmra.mrb[0].mxu0 %v408
      %v410 = vpop.f32.mrb[0].mxu0
      %v411 = vadd.f32 %v311, %v410
      %v412 = vpop.f32.mrb[0].mxu0
      %413 = vmatprep.mubr.f32.mxu0 0.0
      %v414 = vand.u32 %v284, 4294901760
      %v415 = vsub.f32 %v284, %v414
      %v416 = vand.u32 %v415, 4294901760
      %v417 = vsub.f32 %v415, %v416
      %v418 = vand.u32 %v417, 4294901760
      %419 = vmatmul.mubr.f32.gmra.mrb[0].mxu0 %v418
      %v420 = vpop.f32.mrb[0].mxu0
      %v421 = vadd.f32 %v311, %v420
      %v422 = vpop.f32.mrb[0].mxu0
      %423 = vmatprep.mubr.f32.mxu0 0.0
      %v424 = vand.u32 %v285, 4294901760
      %v425 = vsub.f32 %v285, %v424
      %v426 = vand.u32 %v425, 4294901760
      %v427 = vsub.f32 %v425, %v426
      %v428 = vand.u32 %v427, 4294901760
      %429 = vmatmul.mubr.f32.gmra.mrb[0].mxu0 %v428
      %v430 = vpop.f32.mrb[0].mxu0
      %v431 = vadd.f32 %v311, %v430
      %v432 = vpop.f32.mrb[0].mxu0
      %433 = vmatprep.mubr.f32.mxu0 0.0
      %v434 = vand.u32 %v286, 4294901760
      %v435 = vsub.f32 %v286, %v434
      %v436 = vand.u32 %v435, 4294901760
      %v437 = vsub.f32 %v435, %v436
      %v438 = vand.u32 %v437, 4294901760
      %439 = vmatmul.mubr.f32.gmra.mrb[0].mxu0 %v438
      %v440 = vpop.f32.mrb[0].mxu0
      %v441 = vadd.f32 %v311, %v440
      %v442 = vpop.f32.mrb[0].mxu0
      %443 = vmatprep.mubr.f32.mxu0 0.0
      %v444 = vand.u32 %v287, 4294901760
      %v445 = vsub.f32 %v287, %v444
      %v446 = vand.u32 %v445, 4294901760
      %v447 = vsub.f32 %v445, %v446
      %v448 = vand.u32 %v447, 4294901760
      %449 = vmatmul.mubr.f32.gmra.mrb[0].mxu0 %v448
      %v450 = vpop.f32.mrb[0].mxu0
      %v451 = vadd.f32 %v311, %v450
      %v452 = vpop.f32.mrb[0].mxu0
      %453 = vmatprep.mubr.f32.mxu0 0.0
      %v454 = vand.u32 %v288, 4294901760
      %v455 = vsub.f32 %v288, %v454
      %v456 = vand.u32 %v455, 4294901760
      %v457 = vsub.f32 %v455, %v456
      %v458 = vand.u32 %v457, 4294901760
      %459 = vmatmul.mubr.f32.gmra.mrb[0].mxu0 %v458
      %v460 = vpop.f32.mrb[0].mxu0
      %v461 = vadd.f32 %v311, %v460
      %v462 = vpop.f32.mrb[0].mxu0
      %463 = vmatprep.mubr.f32.mxu0 0.0
      %v464 = vand.u32 %v289, 4294901760
      %v465 = vsub.f32 %v289, %v464
      %v466 = vand.u32 %v465, 4294901760
      %v467 = vsub.f32 %v465, %v466
      %v468 = vand.u32 %v467, 4294901760
      %469 = vmatmul.mubr.f32.gmra.mrb[0].mxu0 %v468
      %v470 = vpop.f32.mrb[0].mxu0
      %v471 = vadd.f32 %v311, %v470
      %v472 = vpop.f32.mrb[0].mxu0
      %473 = vdwg.mxu0
      %474 = vmatprep.subr.mxu0 0.0
      %v475 = vand.u32 %v290, 4294901760
      %v476 = vsub.f32 %v290, %v475
      %v477 = vand.u32 %v476, 4294901760
      %v478 = vsub.f32 %v476, %v477
      %v479 = vand.u32 %v478, 4294901760
      %480 = vmatpush1.msra.mxu0 %v479
      %481 = vmatprep.subr.mxu0 0.0
      %v482 = vand.u32 %v291, 4294901760
      %v483 = vsub.f32 %v291, %v482
      %v484 = vand.u32 %v483, 4294901760
      %v485 = vsub.f32 %v483, %v484
      %v486 = vand.u32 %v485, 4294901760
      %487 = vmatpush1.msra.mxu0 %v486
      %488 = vmatprep.subr.mxu0 0.0
      %v489 = vand.u32 %v292, 4294901760
      %v490 = vsub.f32 %v292, %v489
      %v491 = vand.u32 %v490, 4294901760
      %v492 = vsub.f32 %v490, %v491
      %v493 = vand.u32 %v492, 4294901760
      %494 = vmatpush1.msra.mxu0 %v493
      %495 = vmatprep.subr.mxu0 0.0
      %v496 = vand.u32 %v293, 4294901760
      %v497 = vsub.f32 %v293, %v496
      %v498 = vand.u32 %v497, 4294901760
      %v499 = vsub.f32 %v497, %v498
      %v500 = vand.u32 %v499, 4294901760
      %501 = vmatpush1.msra.mxu0 %v500
      %502 = vmatprep.subr.mxu0 0.0
      %v503 = vand.u32 %v294, 4294901760
      %v504 = vsub.f32 %v294, %v503
      %v505 = vand.u32 %v504, 4294901760
      %v506 = vsub.f32 %v504, %v505
      %v507 = vand.u32 %v506, 4294901760
      %508 = vmatpush1.msra.mxu0 %v507
      %509 = vmatprep.subr.mxu0 0.0
      %v510 = vand.u32 %v295, 4294901760
      %v511 = vsub.f32 %v295, %v510
      %v512 = vand.u32 %v511, 4294901760
      %v513 = vsub.f32 %v511, %v512
      %v514 = vand.u32 %v513, 4294901760
      %515 = vmatpush1.msra.mxu0 %v514
      %516 = vmatprep.subr.mxu0 0.0
      %v517 = vand.u32 %v296, 4294901760
      %v518 = vsub.f32 %v296, %v517
      %v519 = vand.u32 %v518, 4294901760
      %v520 = vsub.f32 %v518, %v519
      %v521 = vand.u32 %v520, 4294901760
      %522 = vmatpush1.msra.mxu0 %v521
      %523 = vmatprep.subr.mxu0 0.0
      %v524 = vand.u32 %v297, 4294901760
      %v525 = vsub.f32 %v297, %v524
      %v526 = vand.u32 %v525, 4294901760
      %v527 = vsub.f32 %v525, %v526
      %v528 = vand.u32 %v527, 4294901760
      %529 = vmatpush1.msra.mxu0 %v528
      %530 = vmatprep.subr.mxu0 0.0
      %v531 = vand.u32 %v298, 4294901760
      %v532 = vsub.f32 %v298, %v531
      %v533 = vand.u32 %v532, 4294901760
      %v534 = vsub.f32 %v532, %v533
      %v535 = vand.u32 %v534, 4294901760
      %536 = vmatpush1.msra.mxu0 %v535
      %537 = vmatprep.subr.mxu0 0.0
      %v538 = vand.u32 %v299, 4294901760
      %v539 = vsub.f32 %v299, %v538
      %v540 = vand.u32 %v539, 4294901760
      %v541 = vsub.f32 %v539, %v540
      %v542 = vand.u32 %v541, 4294901760
      %543 = vmatpush1.msra.mxu0 %v542
      %544 = vmatprep.subr.mxu0 0.0
      %v545 = vand.u32 %v300, 4294901760
      %v546 = vsub.f32 %v300, %v545
      %v547 = vand.u32 %v546, 4294901760
      %v548 = vsub.f32 %v546, %v547
      %v549 = vand.u32 %v548, 4294901760
      %550 = vmatpush1.msra.mxu0 %v549
      %551 = vmatprep.subr.mxu0 0.0
      %v552 = vand.u32 %v301, 4294901760
      %v553 = vsub.f32 %v301, %v552
      %v554 = vand.u32 %v553, 4294901760
      %v555 = vsub.f32 %v553, %v554
      %v556 = vand.u32 %v555, 4294901760
      %557 = vmatpush1.msra.mxu0 %v556
      %558 = vmatprep.subr.mxu0 0.0
      %v559 = vand.u32 %v302, 4294901760
      %v560 = vsub.f32 %v302, %v559
      %v561 = vand.u32 %v560, 4294901760
      %v562 = vsub.f32 %v560, %v561
      %v563 = vand.u32 %v562, 4294901760
      %564 = vmatpush1.msra.mxu0 %v563
      %565 = vmatprep.subr.mxu0 0.0
      %v566 = vand.u32 %v303, 4294901760
      %v567 = vsub.f32 %v303, %v566
      %v568 = vand.u32 %v567, 4294901760
      %v569 = vsub.f32 %v567, %v568
      %v570 = vand.u32 %v569, 4294901760
      %571 = vmatpush1.msra.mxu0 %v570
      %572 = vmatprep.subr.mxu0 0.0
      %v573 = vand.u32 %v304, 4294901760
      %v574 = vsub.f32 %v304, %v573
      %v575 = vand.u32 %v574, 4294901760
      %v576 = vsub.f32 %v574, %v575
      %v577 = vand.u32 %v576, 4294901760
      %578 = vmatpush1.msra.mxu0 %v577
      %579 = vmatprep.subr.mxu0 0.0
      %v580 = vand.u32 %v305, 4294901760
      %v581 = vsub.f32 %v305, %v580
      %v582 = vand.u32 %v581, 4294901760
      %v583 = vsub.f32 %v581, %v582
      %v584 = vand.u32 %v583, 4294901760
      %585 = vmatpush1.msra.mxu0 %v584
      %586 = vmatprep.subr.mxu0 0.0
      %587 = vmatpush1.msra.mxu0 0.0
      %588 = vmatprep.subr.mxu0 0.0
      %589 = vmatpush1.msra.mxu0 0.0
      %590 = vmatprep.subr.mxu0 0.0
      %591 = vmatpush1.msra.mxu0 0.0
      %592 = vmatprep.subr.mxu0 0.0
      %593 = vmatpush1.msra.mxu0 0.0
      %594 = vmatprep.subr.mxu0 0.0
      %595 = vmatpush1.msra.mxu0 0.0
      %596 = vmatprep.subr.mxu0 0.0
      %597 = vmatpush1.msra.mxu0 0.0
      %598 = vmatprep.subr.mxu0 0.0
      %599 = vmatpush1.msra.mxu0 0.0
      %600 = vmatprep.subr.mxu0 0.0
      %601 = vmatpush1.msra.mxu0 0.0
      %602 = vmatprep.subr.mxu0 0.0
      %603 = vmatpush1.msra.mxu0 0.0
      %604 = vmatprep.subr.mxu0 0.0
      %605 = vmatpush1.msra.mxu0 0.0
      %606 = vmatprep.subr.mxu0 0.0
      %607 = vmatpush1.msra.mxu0 0.0
      %608 = vmatprep.subr.mxu0 0.0
      %609 = vmatpush1.msra.mxu0 0.0
      %610 = vmatprep.subr.mxu0 0.0
      %611 = vmatpush1.msra.mxu0 0.0
      %612 = vmatprep.subr.mxu0 0.0
      %613 = vmatpush1.msra.mxu0 0.0
      %614 = vmatprep.subr.mxu0 0.0
      %615 = vmatpush1.msra.mxu0 0.0
      %616 = vmatprep.subr.mxu0 0.0
      %617 = vmatpush1.msra.mxu0 0.0
      %618 = vmatprep.mubr.f32.mxu0 0.0
      %v619 = vand.u32 %v282, 4294901760
      %620 = vmatmul.mubr.f32.gmra.mrb[0].mxu0 %v619
      %v621 = vpop.f32.mrb[0].mxu0
      %v622 = vadd.f32 %v401, %v621
      %v623 = vpop.f32.mrb[0].mxu0
      %624 = vmatprep.mubr.f32.mxu0 0.0
      %v625 = vand.u32 %v283, 4294901760
      %626 = vmatmul.mubr.f32.gmra.mrb[0].mxu0 %v625
      %v627 = vpop.f32.mrb[0].mxu0
      %v628 = vadd.f32 %v411, %v627
      %v629 = vpop.f32.mrb[0].mxu0
      %630 = vmatprep.mubr.f32.mxu0 0.0
      %v631 = vand.u32 %v284, 4294901760
      %632 = vmatmul.mubr.f32.gmra.mrb[0].mxu0 %v631
      %v633 = vpop.f32.mrb[0].mxu0
      %v634 = vadd.f32 %v421, %v633
      %v635 = vpop.f32.mrb[0].mxu0
      %636 = vmatprep.mubr.f32.mxu0 0.0
      %v637 = vand.u32 %v285, 4294901760
      %638 = vmatmul.mubr.f32.gmra.mrb[0].mxu0 %v637
      %v639 = vpop.f32.mrb[0].mxu0
      %v640 = vadd.f32 %v431, %v639
      %v641 = vpop.f32.mrb[0].mxu0
      %642 = vmatprep.mubr.f32.mxu0 0.0
      %v643 = vand.u32 %v286, 4294901760
      %644 = vmatmul.mubr.f32.gmra.mrb[0].mxu0 %v643
      %v645 = vpop.f32.mrb[0].mxu0
      %v646 = vadd.f32 %v441, %v645
      %v647 = vpop.f32.mrb[0].mxu0
      %648 = vmatprep.mubr.f32.mxu0 0.0
      %v649 = vand.u32 %v287, 4294901760
      %650 = vmatmul.mubr.f32.gmra.mrb[0].mxu0 %v649
      %v651 = vpop.f32.mrb[0].mxu0
      %v652 = vadd.f32 %v451, %v651
      %v653 = vpop.f32.mrb[0].mxu0
      %654 = vmatprep.mubr.f32.mxu0 0.0
      %v655 = vand.u32 %v288, 4294901760
      %656 = vmatmul.mubr.f32.gmra.mrb[0].mxu0 %v655
      %v657 = vpop.f32.mrb[0].mxu0
      %v658 = vadd.f32 %v461, %v657
      %v659 = vpop.f32.mrb[0].mxu0
      %660 = vmatprep.mubr.f32.mxu0 0.0
      %v661 = vand.u32 %v289, 4294901760
      %662 = vmatmul.mubr.f32.gmra.mrb[0].mxu0 %v661
      %v663 = vpop.f32.mrb[0].mxu0
      %v664 = vadd.f32 %v471, %v663
      %v665 = vpop.f32.mrb[0].mxu0
      %666 = vdwg.mxu0
      %667 = vmatprep.subr.mxu0 0.0
      %v668 = vand.u32 %v290, 4294901760
      %v669 = vsub.f32 %v290, %v668
      %670 = vmatpush1.msra.mxu0 %v669
      %671 = vmatprep.subr.mxu0 0.0
      %v672 = vand.u32 %v291, 4294901760
      %v673 = vsub.f32 %v291, %v672
      %674 = vmatpush1.msra.mxu0 %v673
      %675 = vmatprep.subr.mxu0 0.0
      %v676 = vand.u32 %v292, 4294901760
      %v677 = vsub.f32 %v292, %v676
      %678 = vmatpush1.msra.mxu0 %v677
      %679 = vmatprep.subr.mxu0 0.0
      %v680 = vand.u32 %v293, 4294901760
      %v681 = vsub.f32 %v293, %v680
      %682 = vmatpush1.msra.mxu0 %v681
      %683 = vmatprep.subr.mxu0 0.0
      %v684 = vand.u32 %v294, 4294901760
      %v685 = vsub.f32 %v294, %v684
      %686 = vmatpush1.msra.mxu0 %v685
      %687 = vmatprep.subr.mxu0 0.0
      %v688 = vand.u32 %v295, 4294901760
      %v689 = vsub.f32 %v295, %v688
      %690 = vmatpush1.msra.mxu0 %v689
      %691 = vmatprep.subr.mxu0 0.0
      %v692 = vand.u32 %v296, 4294901760
      %v693 = vsub.f32 %v296, %v692
      %694 = vmatpush1.msra.mxu0 %v693
      %695 = vmatprep.subr.mxu0 0.0
      %v696 = vand.u32 %v297, 4294901760
      %v697 = vsub.f32 %v297, %v696
      %698 = vmatpush1.msra.mxu0 %v697
      %699 = vmatprep.subr.mxu0 0.0
      %v700 = vand.u32 %v298, 4294901760
      %v701 = vsub.f32 %v298, %v700
      %702 = vmatpush1.msra.mxu0 %v701
      %703 = vmatprep.subr.mxu0 0.0
      %v704 = vand.u32 %v299, 4294901760
      %v705 = vsub.f32 %v299, %v704
      %706 = vmatpush1.msra.mxu0 %v705
      %707 = vmatprep.subr.mxu0 0.0
      %v708 = vand.u32 %v300, 4294901760
      %v709 = vsub.f32 %v300, %v708
      %710 = vmatpush1.msra.mxu0 %v709
      %711 = vmatprep.subr.mxu0 0.0
      %v712 = vand.u32 %v301, 4294901760
      %v713 = vsub.f32 %v301, %v712
      %714 = vmatpush1.msra.mxu0 %v713
      %715 = vmatprep.subr.mxu0 0.0
      %v716 = vand.u32 %v302, 4294901760
      %v717 = vsub.f32 %v302, %v716
      %718 = vmatpush1.msra.mxu0 %v717
      %719 = vmatprep.subr.mxu0 0.0
      %v720 = vand.u32 %v303, 4294901760
      %v721 = vsub.f32 %v303, %v720
      %722 = vmatpush1.msra.mxu0 %v721
      %723 = vmatprep.subr.mxu0 0.0
      %v724 = vand.u32 %v304, 4294901760
      %v725 = vsub.f32 %v304, %v724
      %726 = vmatpush1.msra.mxu0 %v725
      %727 = vmatprep.subr.mxu0 0.0
      %v728 = vand.u32 %v305, 4294901760
      %v729 = vsub.f32 %v305, %v728
      %730 = vmatpush1.msra.mxu0 %v729
      %731 = vmatprep.subr.mxu0 0.0
      %732 = vmatpush1.msra.mxu0 0.0
      %733 = vmatprep.subr.mxu0 0.0
      %734 = vmatpush1.msra.mxu0 0.0
      %735 = vmatprep.subr.mxu0 0.0
      %736 = vmatpush1.msra.mxu0 0.0
      %737 = vmatprep.subr.mxu0 0.0
      %738 = vmatpush1.msra.mxu0 0.0
      %739 = vmatprep.subr.mxu0 0.0
      %740 = vmatpush1.msra.mxu0 0.0
      %741 = vmatprep.subr.mxu0 0.0
      %742 = vmatpush1.msra.mxu0 0.0
      %743 = vmatprep.subr.mxu0 0.0
      %744 = vmatpush1.msra.mxu0 0.0
      %745 = vmatprep.subr.mxu0 0.0
      %746 = vmatpush1.msra.mxu0 0.0
      %747 = vmatprep.subr.mxu0 0.0
      %748 = vmatpush1.msra.mxu0 0.0
      %749 = vmatprep.subr.mxu0 0.0
      %750 = vmatpush1.msra.mxu0 0.0
      %751 = vmatprep.subr.mxu0 0.0
      %752 = vmatpush1.msra.mxu0 0.0
      %753 = vmatprep.subr.mxu0 0.0
      %754 = vmatpush1.msra.mxu0 0.0
      %755 = vmatprep.subr.mxu0 0.0
      %756 = vmatpush1.msra.mxu0 0.0
      %757 = vmatprep.subr.mxu0 0.0
      %758 = vmatpush1.msra.mxu0 0.0
      %759 = vmatprep.subr.mxu0 0.0
      %760 = vmatpush1.msra.mxu0 0.0
      %761 = vmatprep.subr.mxu0 0.0
      %762 = vmatpush1.msra.mxu0 0.0
      %763 = vmatprep.mubr.f32.mxu0 0.0
      %v764 = vand.u32 %v282, 4294901760
      %v765 = vsub.f32 %v282, %v764
      %766 = vmatmul.mubr.f32.gmra.mrb[0].mxu0 %v765
      %v767 = vpop.f32.mrb[0].mxu0
      %v768 = vadd.f32 %v622, %v767
      %v769 = vpop.f32.mrb[0].mxu0
      %770 = vmatprep.mubr.f32.mxu0 0.0
      %v771 = vand.u32 %v283, 4294901760
      %v772 = vsub.f32 %v283, %v771
      %773 = vmatmul.mubr.f32.gmra.mrb[0].mxu0 %v772
      %v774 = vpop.f32.mrb[0].mxu0
      %v775 = vadd.f32 %v628, %v774
      %v776 = vpop.f32.mrb[0].mxu0
      %777 = vmatprep.mubr.f32.mxu0 0.0
      %v778 = vand.u32 %v284, 4294901760
      %v779 = vsub.f32 %v284, %v778
      %780 = vmatmul.mubr.f32.gmra.mrb[0].mxu0 %v779
      %v781 = vpop.f32.mrb[0].mxu0
      %v782 = vadd.f32 %v634, %v781
      %v783 = vpop.f32.mrb[0].mxu0
      %784 = vmatprep.mubr.f32.mxu0 0.0
      %v785 = vand.u32 %v285, 4294901760
      %v786 = vsub.f32 %v285, %v785
      %787 = vmatmul.mubr.f32.gmra.mrb[0].mxu0 %v786
      %v788 = vpop.f32.mrb[0].mxu0
      %v789 = vadd.f32 %v640, %v788
      %v790 = vpop.f32.mrb[0].mxu0
      %791 = vmatprep.mubr.f32.mxu0 0.0
      %v792 = vand.u32 %v286, 4294901760
      %v793 = vsub.f32 %v286, %v792
      %794 = vmatmul.mubr.f32.gmra.mrb[0].mxu0 %v793
      %v795 = vpop.f32.mrb[0].mxu0
      %v796 = vadd.f32 %v646, %v795
      %v797 = vpop.f32.mrb[0].mxu0
      %798 = vmatprep.mubr.f32.mxu0 0.0
      %v799 = vand.u32 %v287, 4294901760
      %v800 = vsub.f32 %v287, %v799
      %801 = vmatmul.mubr.f32.gmra.mrb[0].mxu0 %v800
      %v802 = vpop.f32.mrb[0].mxu0
      %v803 = vadd.f32 %v652, %v802
      %v804 = vpop.f32.mrb[0].mxu0
      %805 = vmatprep.mubr.f32.mxu0 0.0
      %v806 = vand.u32 %v288, 4294901760
      %v807 = vsub.f32 %v288, %v806
      %808 = vmatmul.mubr.f32.gmra.mrb[0].mxu0 %v807
      %v809 = vpop.f32.mrb[0].mxu0
      %v810 = vadd.f32 %v658, %v809
      %v811 = vpop.f32.mrb[0].mxu0
      %812 = vmatprep.mubr.f32.mxu0 0.0
      %v813 = vand.u32 %v289, 4294901760
      %v814 = vsub.f32 %v289, %v813
      %815 = vmatmul.mubr.f32.gmra.mrb[0].mxu0 %v814
      %v816 = vpop.f32.mrb[0].mxu0
      %v817 = vadd.f32 %v664, %v816
      %v818 = vpop.f32.mrb[0].mxu0
      %819 = vdwg.mxu0
      %820 = vmatprep.subr.mxu0 0.0
      %v821 = vand.u32 %v290, 4294901760
      %822 = vmatpush1.msra.mxu0 %v821
      %823 = vmatprep.subr.mxu0 0.0
      %v824 = vand.u32 %v291, 4294901760
      %825 = vmatpush1.msra.mxu0 %v824
      %826 = vmatprep.subr.mxu0 0.0
      %v827 = vand.u32 %v292, 4294901760
      %828 = vmatpush1.msra.mxu0 %v827
      %829 = vmatprep.subr.mxu0 0.0
      %v830 = vand.u32 %v293, 4294901760
      %831 = vmatpush1.msra.mxu0 %v830
      %832 = vmatprep.subr.mxu0 0.0
      %v833 = vand.u32 %v294, 4294901760
      %834 = vmatpush1.msra.mxu0 %v833
      %835 = vmatprep.subr.mxu0 0.0
      %v836 = vand.u32 %v295, 4294901760
      %837 = vmatpush1.msra.mxu0 %v836
      %838 = vmatprep.subr.mxu0 0.0
      %v839 = vand.u32 %v296, 4294901760
      %840 = vmatpush1.msra.mxu0 %v839
      %841 = vmatprep.subr.mxu0 0.0
      %v842 = vand.u32 %v297, 4294901760
      %843 = vmatpush1.msra.mxu0 %v842
      %844 = vmatprep.subr.mxu0 0.0
      %v845 = vand.u32 %v298, 4294901760
      %846 = vmatpush1.msra.mxu0 %v845
      %847 = vmatprep.subr.mxu0 0.0
      %v848 = vand.u32 %v299, 4294901760
      %849 = vmatpush1.msra.mxu0 %v848
      %850 = vmatprep.subr.mxu0 0.0
      %v851 = vand.u32 %v300, 4294901760
      %852 = vmatpush1.msra.mxu0 %v851
      %853 = vmatprep.subr.mxu0 0.0
      %v854 = vand.u32 %v301, 4294901760
      %855 = vmatpush1.msra.mxu0 %v854
      %856 = vmatprep.subr.mxu0 0.0
      %v857 = vand.u32 %v302, 4294901760
      %858 = vmatpush1.msra.mxu0 %v857
      %859 = vmatprep.subr.mxu0 0.0
      %v860 = vand.u32 %v303, 4294901760
      %861 = vmatpush1.msra.mxu0 %v860
      %862 = vmatprep.subr.mxu0 0.0
      %v863 = vand.u32 %v304, 4294901760
      %864 = vmatpush1.msra.mxu0 %v863
      %865 = vmatprep.subr.mxu0 0.0
      %v866 = vand.u32 %v305, 4294901760
      %867 = vmatpush1.msra.mxu0 %v866
      %868 = vmatprep.subr.mxu0 0.0
      %869 = vmatpush1.msra.mxu0 0.0
      %870 = vmatprep.subr.mxu0 0.0
      %871 = vmatpush1.msra.mxu0 0.0
      %872 = vmatprep.subr.mxu0 0.0
      %873 = vmatpush1.msra.mxu0 0.0
      %874 = vmatprep.subr.mxu0 0.0
      %875 = vmatpush1.msra.mxu0 0.0
      %876 = vmatprep.subr.mxu0 0.0
      %877 = vmatpush1.msra.mxu0 0.0
      %878 = vmatprep.subr.mxu0 0.0
      %879 = vmatpush1.msra.mxu0 0.0
      %880 = vmatprep.subr.mxu0 0.0
      %881 = vmatpush1.msra.mxu0 0.0
      %882 = vmatprep.subr.mxu0 0.0
      %883 = vmatpush1.msra.mxu0 0.0
      %884 = vmatprep.subr.mxu0 0.0
      %885 = vmatpush1.msra.mxu0 0.0
      %886 = vmatprep.subr.mxu0 0.0
      %887 = vmatpush1.msra.mxu0 0.0
      %888 = vmatprep.subr.mxu0 0.0
      %889 = vmatpush1.msra.mxu0 0.0
      %890 = vmatprep.subr.mxu0 0.0
      %891 = vmatpush1.msra.mxu0 0.0
      %892 = vmatprep.subr.mxu0 0.0
      %893 = vmatpush1.msra.mxu0 0.0
      %894 = vmatprep.subr.mxu0 0.0
      %895 = vmatpush1.msra.mxu0 0.0
      %896 = vmatprep.subr.mxu0 0.0
      %897 = vmatpush1.msra.mxu0 0.0
      %898 = vmatprep.subr.mxu0 0.0
      %899 = vmatpush1.msra.mxu0 0.0
      %900 = vmatprep.mubr.f32.mxu0 0.0
      %v901 = vand.u32 %v282, 4294901760
      %v902 = vsub.f32 %v282, %v901
      %v903 = vand.u32 %v902, 4294901760
      %904 = vmatmul.mubr.f32.gmra.mrb[0].mxu0 %v903
      %v905 = vpop.f32.mrb[0].mxu0
      %v906 = vadd.f32 %v768, %v905
      %v907 = vpop.f32.mrb[0].mxu0
      %908 = vmatprep.mubr.f32.mxu0 0.0
      %v909 = vand.u32 %v283, 4294901760
      %v910 = vsub.f32 %v283, %v909
      %v911 = vand.u32 %v910, 4294901760
      %912 = vmatmul.mubr.f32.gmra.mrb[0].mxu0 %v911
      %v913 = vpop.f32.mrb[0].mxu0
      %v914 = vadd.f32 %v775, %v913
      %v915 = vpop.f32.mrb[0].mxu0
      %916 = vmatprep.mubr.f32.mxu0 0.0
      %v917 = vand.u32 %v284, 4294901760
      %v918 = vsub.f32 %v284, %v917
      %v919 = vand.u32 %v918, 4294901760
      %920 = vmatmul.mubr.f32.gmra.mrb[0].mxu0 %v919
      %v921 = vpop.f32.mrb[0].mxu0
      %v922 = vadd.f32 %v782, %v921
      %v923 = vpop.f32.mrb[0].mxu0
      %924 = vmatprep.mubr.f32.mxu0 0.0
      %v925 = vand.u32 %v285, 4294901760
      %v926 = vsub.f32 %v285, %v925
      %v927 = vand.u32 %v926, 4294901760
      %928 = vmatmul.mubr.f32.gmra.mrb[0].mxu0 %v927
      %v929 = vpop.f32.mrb[0].mxu0
      %v930 = vadd.f32 %v789, %v929
      %v931 = vpop.f32.mrb[0].mxu0
      %932 = vmatprep.mubr.f32.mxu0 0.0
      %v933 = vand.u32 %v286, 4294901760
      %v934 = vsub.f32 %v286, %v933
      %v935 = vand.u32 %v934, 4294901760
      %936 = vmatmul.mubr.f32.gmra.mrb[0].mxu0 %v935
      %v937 = vpop.f32.mrb[0].mxu0
      %v938 = vadd.f32 %v796, %v937
      %v939 = vpop.f32.mrb[0].mxu0
      %940 = vmatprep.mubr.f32.mxu0 0.0
      %v941 = vand.u32 %v287, 4294901760
      %v942 = vsub.f32 %v287, %v941
      %v943 = vand.u32 %v942, 4294901760
      %944 = vmatmul.mubr.f32.gmra.mrb[0].mxu0 %v943
      %v945 = vpop.f32.mrb[0].mxu0
      %v946 = vadd.f32 %v803, %v945
      %v947 = vpop.f32.mrb[0].mxu0
      %948 = vmatprep.mubr.f32.mxu0 0.0
      %v949 = vand.u32 %v288, 4294901760
      %v950 = vsub.f32 %v288, %v949
      %v951 = vand.u32 %v950, 4294901760
      %952 = vmatmul.mubr.f32.gmra.mrb[0].mxu0 %v951
      %v953 = vpop.f32.mrb[0].mxu0
      %v954 = vadd.f32 %v810, %v953
      %v955 = vpop.f32.mrb[0].mxu0
      %956 = vmatprep.mubr.f32.mxu0 0.0
      %v957 = vand.u32 %v289, 4294901760
      %v958 = vsub.f32 %v289, %v957
      %v959 = vand.u32 %v958, 4294901760
      %960 = vmatmul.mubr.f32.gmra.mrb[0].mxu0 %v959
      %v961 = vpop.f32.mrb[0].mxu0
      %v962 = vadd.f32 %v817, %v961
      %v963 = vpop.f32.mrb[0].mxu0
      %964 = vdwg.mxu0
      %965 = vmatprep.subr.mxu0 0.0
      %v966 = vand.u32 %v290, 4294901760
      %v967 = vsub.f32 %v290, %v966
      %v968 = vand.u32 %v967, 4294901760
      %969 = vmatpush1.msra.mxu0 %v968
      %970 = vmatprep.subr.mxu0 0.0
      %v971 = vand.u32 %v291, 4294901760
      %v972 = vsub.f32 %v291, %v971
      %v973 = vand.u32 %v972, 4294901760
      %974 = vmatpush1.msra.mxu0 %v973
      %975 = vmatprep.subr.mxu0 0.0
      %v976 = vand.u32 %v292, 4294901760
      %v977 = vsub.f32 %v292, %v976
      %v978 = vand.u32 %v977, 4294901760
      %979 = vmatpush1.msra.mxu0 %v978
      %980 = vmatprep.subr.mxu0 0.0
      %v981 = vand.u32 %v293, 4294901760
      %v982 = vsub.f32 %v293, %v981
      %v983 = vand.u32 %v982, 4294901760
      %984 = vmatpush1.msra.mxu0 %v983
      %985 = vmatprep.subr.mxu0 0.0
      %v986 = vand.u32 %v294, 4294901760
      %v987 = vsub.f32 %v294, %v986
      %v988 = vand.u32 %v987, 4294901760
      %989 = vmatpush1.msra.mxu0 %v988
      %990 = vmatprep.subr.mxu0 0.0
      %v991 = vand.u32 %v295, 4294901760
      %v992 = vsub.f32 %v295, %v991
      %v993 = vand.u32 %v992, 4294901760
      %994 = vmatpush1.msra.mxu0 %v993
      %995 = vmatprep.subr.mxu0 0.0
      %v996 = vand.u32 %v296, 4294901760
      %v997 = vsub.f32 %v296, %v996
      %v998 = vand.u32 %v997, 4294901760
      %999 = vmatpush1.msra.mxu0 %v998
      %1000 = vmatprep.subr.mxu0 0.0
      %v1001 = vand.u32 %v297, 4294901760
      %v1002 = vsub.f32 %v297, %v1001
      %v1003 = vand.u32 %v1002, 4294901760
      %1004 = vmatpush1.msra.mxu0 %v1003
      %1005 = vmatprep.subr.mxu0 0.0
      %v1006 = vand.u32 %v298, 4294901760
      %v1007 = vsub.f32 %v298, %v1006
      %v1008 = vand.u32 %v1007, 4294901760
      %1009 = vmatpush1.msra.mxu0 %v1008
      %1010 = vmatprep.subr.mxu0 0.0
      %v1011 = vand.u32 %v299, 4294901760
      %v1012 = vsub.f32 %v299, %v1011
      %v1013 = vand.u32 %v1012, 4294901760
      %1014 = vmatpush1.msra.mxu0 %v1013
      %1015 = vmatprep.subr.mxu0 0.0
      %v1016 = vand.u32 %v300, 4294901760
      %v1017 = vsub.f32 %v300, %v1016
      %v1018 = vand.u32 %v1017, 4294901760
      %1019 = vmatpush1.msra.mxu0 %v1018
      %1020 = vmatprep.subr.mxu0 0.0
      %v1021 = vand.u32 %v301, 4294901760
      %v1022 = vsub.f32 %v301, %v1021
      %v1023 = vand.u32 %v1022, 4294901760
      %1024 = vmatpush1.msra.mxu0 %v1023
      %1025 = vmatprep.subr.mxu0 0.0
      %v1026 = vand.u32 %v302, 4294901760
      %v1027 = vsub.f32 %v302, %v1026
      %v1028 = vand.u32 %v1027, 4294901760
      %1029 = vmatpush1.msra.mxu0 %v1028
      %1030 = vmatprep.subr.mxu0 0.0
      %v1031 = vand.u32 %v303, 4294901760
      %v1032 = vsub.f32 %v303, %v1031
      %v1033 = vand.u32 %v1032, 4294901760
      %1034 = vmatpush1.msra.mxu0 %v1033
      %1035 = vmatprep.subr.mxu0 0.0
      %v1036 = vand.u32 %v304, 4294901760
      %v1037 = vsub.f32 %v304, %v1036
      %v1038 = vand.u32 %v1037, 4294901760
      %1039 = vmatpush1.msra.mxu0 %v1038
      %1040 = vmatprep.subr.mxu0 0.0
      %v1041 = vand.u32 %v305, 4294901760
      %v1042 = vsub.f32 %v305, %v1041
      %v1043 = vand.u32 %v1042, 4294901760
      %1044 = vmatpush1.msra.mxu0 %v1043
      %1045 = vmatprep.subr.mxu0 0.0
      %1046 = vmatpush1.msra.mxu0 0.0
      %1047 = vmatprep.subr.mxu0 0.0
      %1048 = vmatpush1.msra.mxu0 0.0
      %1049 = vmatprep.subr.mxu0 0.0
      %1050 = vmatpush1.msra.mxu0 0.0
      %1051 = vmatprep.subr.mxu0 0.0
      %1052 = vmatpush1.msra.mxu0 0.0
      %1053 = vmatprep.subr.mxu0 0.0
      %1054 = vmatpush1.msra.mxu0 0.0
      %1055 = vmatprep.subr.mxu0 0.0
      %1056 = vmatpush1.msra.mxu0 0.0
      %1057 = vmatprep.subr.mxu0 0.0
      %1058 = vmatpush1.msra.mxu0 0.0
      %1059 = vmatprep.subr.mxu0 0.0
      %1060 = vmatpush1.msra.mxu0 0.0
      %1061 = vmatprep.subr.mxu0 0.0
      %1062 = vmatpush1.msra.mxu0 0.0
      %1063 = vmatprep.subr.mxu0 0.0
      %1064 = vmatpush1.msra.mxu0 0.0
      %1065 = vmatprep.subr.mxu0 0.0
      %1066 = vmatpush1.msra.mxu0 0.0
      %1067 = vmatprep.subr.mxu0 0.0
      %1068 = vmatpush1.msra.mxu0 0.0
      %1069 = vmatprep.subr.mxu0 0.0
      %1070 = vmatpush1.msra.mxu0 0.0
      %1071 = vmatprep.subr.mxu0 0.0
      %1072 = vmatpush1.msra.mxu0 0.0
      %1073 = vmatprep.subr.mxu0 0.0
      %1074 = vmatpush1.msra.mxu0 0.0
      %1075 = vmatprep.subr.mxu0 0.0
      %1076 = vmatpush1.msra.mxu0 0.0
      %1077 = vmatprep.mubr.f32.mxu0 0.0
      %v1078 = vand.u32 %v282, 4294901760
      %1079 = vmatmul.mubr.f32.gmra.mrb[0].mxu0 %v1078
      %v1080 = vpop.f32.mrb[0].mxu0
      %v1081 = vadd.f32 %v906, %v1080
      %v1082 = vpop.f32.mrb[0].mxu0
      %1083 = vmatprep.mubr.f32.mxu0 0.0
      %v1084 = vand.u32 %v283, 4294901760
      %1085 = vmatmul.mubr.f32.gmra.mrb[0].mxu0 %v1084
      %v1086 = vpop.f32.mrb[0].mxu0
      %v1087 = vadd.f32 %v914, %v1086
      %v1088 = vpop.f32.mrb[0].mxu0
      %1089 = vmatprep.mubr.f32.mxu0 0.0
      %v1090 = vand.u32 %v284, 4294901760
      %1091 = vmatmul.mubr.f32.gmra.mrb[0].mxu0 %v1090
      %v1092 = vpop.f32.mrb[0].mxu0
      %v1093 = vadd.f32 %v922, %v1092
      %v1094 = vpop.f32.mrb[0].mxu0
      %1095 = vmatprep.mubr.f32.mxu0 0.0
      %v1096 = vand.u32 %v285, 4294901760
      %1097 = vmatmul.mubr.f32.gmra.mrb[0].mxu0 %v1096
      %v1098 = vpop.f32.mrb[0].mxu0
      %v1099 = vadd.f32 %v930, %v1098
      %v1100 = vpop.f32.mrb[0].mxu0
      %1101 = vmatprep.mubr.f32.mxu0 0.0
      %v1102 = vand.u32 %v286, 4294901760
      %1103 = vmatmul.mubr.f32.gmra.mrb[0].mxu0 %v1102
      %v1104 = vpop.f32.mrb[0].mxu0
      %v1105 = vadd.f32 %v938, %v1104
      %v1106 = vpop.f32.mrb[0].mxu0
      %1107 = vmatprep.mubr.f32.mxu0 0.0
      %v1108 = vand.u32 %v287, 4294901760
      %1109 = vmatmul.mubr.f32.gmra.mrb[0].mxu0 %v1108
      %v1110 = vpop.f32.mrb[0].mxu0
      %v1111 = vadd.f32 %v946, %v1110
      %v1112 = vpop.f32.mrb[0].mxu0
      %1113 = vmatprep.mubr.f32.mxu0 0.0
      %v1114 = vand.u32 %v288, 4294901760
      %1115 = vmatmul.mubr.f32.gmra.mrb[0].mxu0 %v1114
      %v1116 = vpop.f32.mrb[0].mxu0
      %v1117 = vadd.f32 %v954, %v1116
      %v1118 = vpop.f32.mrb[0].mxu0
      %1119 = vmatprep.mubr.f32.mxu0 0.0
      %v1120 = vand.u32 %v289, 4294901760
      %1121 = vmatmul.mubr.f32.gmra.mrb[0].mxu0 %v1120
      %v1122 = vpop.f32.mrb[0].mxu0
      %v1123 = vadd.f32 %v962, %v1122
      %v1124 = vpop.f32.mrb[0].mxu0
      %1125 = vdwg.mxu0
      %1126 = vmatprep.subr.mxu0 0.0
      %v1127 = vand.u32 %v290, 4294901760
      %1128 = vmatpush1.msra.mxu0 %v1127
      %1129 = vmatprep.subr.mxu0 0.0
      %v1130 = vand.u32 %v291, 4294901760
      %1131 = vmatpush1.msra.mxu0 %v1130
      %1132 = vmatprep.subr.mxu0 0.0
      %v1133 = vand.u32 %v292, 4294901760
      %1134 = vmatpush1.msra.mxu0 %v1133
      %1135 = vmatprep.subr.mxu0 0.0
      %v1136 = vand.u32 %v293, 4294901760
      %1137 = vmatpush1.msra.mxu0 %v1136
      %1138 = vmatprep.subr.mxu0 0.0
      %v1139 = vand.u32 %v294, 4294901760
      %1140 = vmatpush1.msra.mxu0 %v1139
      %1141 = vmatprep.subr.mxu0 0.0
      %v1142 = vand.u32 %v295, 4294901760
      %1143 = vmatpush1.msra.mxu0 %v1142
      %1144 = vmatprep.subr.mxu0 0.0
      %v1145 = vand.u32 %v296, 4294901760
      %1146 = vmatpush1.msra.mxu0 %v1145
      %1147 = vmatprep.subr.mxu0 0.0
      %v1148 = vand.u32 %v297, 4294901760
      %1149 = vmatpush1.msra.mxu0 %v1148
      %1150 = vmatprep.subr.mxu0 0.0
      %v1151 = vand.u32 %v298, 4294901760
      %1152 = vmatpush1.msra.mxu0 %v1151
      %1153 = vmatprep.subr.mxu0 0.0
      %v1154 = vand.u32 %v299, 4294901760
      %1155 = vmatpush1.msra.mxu0 %v1154
      %1156 = vmatprep.subr.mxu0 0.0
      %v1157 = vand.u32 %v300, 4294901760
      %1158 = vmatpush1.msra.mxu0 %v1157
      %1159 = vmatprep.subr.mxu0 0.0
      %v1160 = vand.u32 %v301, 4294901760
      %1161 = vmatpush1.msra.mxu0 %v1160
      %1162 = vmatprep.subr.mxu0 0.0
      %v1163 = vand.u32 %v302, 4294901760
      %1164 = vmatpush1.msra.mxu0 %v1163
      %1165 = vmatprep.subr.mxu0 0.0
      %v1166 = vand.u32 %v303, 4294901760
      %1167 = vmatpush1.msra.mxu0 %v1166
      %1168 = vmatprep.subr.mxu0 0.0
      %v1169 = vand.u32 %v304, 4294901760
      %1170 = vmatpush1.msra.mxu0 %v1169
      %1171 = vmatprep.subr.mxu0 0.0
      %v1172 = vand.u32 %v305, 4294901760
      %1173 = vmatpush1.msra.mxu0 %v1172
      %1174 = vmatprep.subr.mxu0 0.0
      %1175 = vmatpush1.msra.mxu0 0.0
      %1176 = vmatprep.subr.mxu0 0.0
      %1177 = vmatpush1.msra.mxu0 0.0
      %1178 = vmatprep.subr.mxu0 0.0
      %1179 = vmatpush1.msra.mxu0 0.0
      %1180 = vmatprep.subr.mxu0 0.0
      %1181 = vmatpush1.msra.mxu0 0.0
      %1182 = vmatprep.subr.mxu0 0.0
      %1183 = vmatpush1.msra.mxu0 0.0
      %1184 = vmatprep.subr.mxu0 0.0
      %1185 = vmatpush1.msra.mxu0 0.0
      %1186 = vmatprep.subr.mxu0 0.0
      %1187 = vmatpush1.msra.mxu0 0.0
      %1188 = vmatprep.subr.mxu0 0.0
      %1189 = vmatpush1.msra.mxu0 0.0
      %1190 = vmatprep.subr.mxu0 0.0
      %1191 = vmatpush1.msra.mxu0 0.0
      %1192 = vmatprep.subr.mxu0 0.0
      %1193 = vmatpush1.msra.mxu0 0.0
      %1194 = vmatprep.subr.mxu0 0.0
      %1195 = vmatpush1.msra.mxu0 0.0
      %1196 = vmatprep.subr.mxu0 0.0
      %1197 = vmatpush1.msra.mxu0 0.0
      %1198 = vmatprep.subr.mxu0 0.0
      %1199 = vmatpush1.msra.mxu0 0.0
      %1200 = vmatprep.subr.mxu0 0.0
      %1201 = vmatpush1.msra.mxu0 0.0
      %1202 = vmatprep.subr.mxu0 0.0
      %1203 = vmatpush1.msra.mxu0 0.0
      %1204 = vmatprep.subr.mxu0 0.0
      %1205 = vmatpush1.msra.mxu0 0.0
      %1206 = vmatprep.mubr.f32.mxu0 0.0
      %v1207 = vand.u32 %v282, 4294901760
      %1208 = vmatmul.mubr.f32.gmra.mrb[0].mxu0 %v1207
      %v1209 = vpop.f32.mrb[0].mxu0
      %v1210 = vadd.f32 %v1081, %v1209
      %v1211 = vpop.f32.mrb[0].mxu0
      %1212 = vmatprep.mubr.f32.mxu0 0.0
      %v1213 = vand.u32 %v283, 4294901760
      %1214 = vmatmul.mubr.f32.gmra.mrb[0].mxu0 %v1213
      %v1215 = vpop.f32.mrb[0].mxu0
      %v1216 = vadd.f32 %v1087, %v1215
      %v1217 = vpop.f32.mrb[0].mxu0
      %1218 = vmatprep.mubr.f32.mxu0 0.0
      %v1219 = vand.u32 %v284, 4294901760
      %1220 = vmatmul.mubr.f32.gmra.mrb[0].mxu0 %v1219
      %v1221 = vpop.f32.mrb[0].mxu0
      %v1222 = vadd.f32 %v1093, %v1221
      %v1223 = vpop.f32.mrb[0].mxu0
      %1224 = vmatprep.mubr.f32.mxu0 0.0
      %v1225 = vand.u32 %v285, 4294901760
      %1226 = vmatmul.mubr.f32.gmra.mrb[0].mxu0 %v1225
      %v1227 = vpop.f32.mrb[0].mxu0
      %v1228 = vadd.f32 %v1099, %v1227
      %v1229 = vpop.f32.mrb[0].mxu0
      %1230 = vmatprep.mubr.f32.mxu0 0.0
      %v1231 = vand.u32 %v286, 4294901760
      %1232 = vmatmul.mubr.f32.gmra.mrb[0].mxu0 %v1231
      %v1233 = vpop.f32.mrb[0].mxu0
      %v1234 = vadd.f32 %v1105, %v1233
      %v1235 = vpop.f32.mrb[0].mxu0
      %1236 = vmatprep.mubr.f32.mxu0 0.0
      %v1237 = vand.u32 %v287, 4294901760
      %1238 = vmatmul.mubr.f32.gmra.mrb[0].mxu0 %v1237
      %v1239 = vpop.f32.mrb[0].mxu0
      %v1240 = vadd.f32 %v1111, %v1239
      %v1241 = vpop.f32.mrb[0].mxu0
      %1242 = vmatprep.mubr.f32.mxu0 0.0
      %v1243 = vand.u32 %v288, 4294901760
      %1244 = vmatmul.mubr.f32.gmra.mrb[0].mxu0 %v1243
      %v1245 = vpop.f32.mrb[0].mxu0
      %v1246 = vadd.f32 %v1117, %v1245
      %v1247 = vpop.f32.mrb[0].mxu0
      %1248 = vmatprep.mubr.f32.mxu0 0.0
      %v1249 = vand.u32 %v289, 4294901760
      %1250 = vmatmul.mubr.f32.gmra.mrb[0].mxu0 %v1249
      %v1251 = vpop.f32.mrb[0].mxu0
      %v1252 = vadd.f32 %v1123, %v1251
      %v1253 = vpop.f32.mrb[0].mxu0
      %1254 = vdwg.mxu0
      %v1255 = vmax.f32 %v1210, 0.0
      %v1256 = vmax.f32 %v1216, 0.0
      %v1257 = vmax.f32 %v1222, 0.0
      %v1258 = vmax.f32 %v1228, 0.0
      %v1259 = vmax.f32 %v1234, 0.0
      %v1260 = vmax.f32 %v1240, 0.0
      %v1261 = vmax.f32 %v1246, 0.0
      %v1262 = vmax.f32 %v1252, 0.0
      %v1263 = vld [vmem:[%s3] sm:$0xff]
      %v1264 = vld [vmem:[%s3 + $0x8] sm:$0xff]
      %v1265 = vld [vmem:[%s3 + $0x10] sm:$0xff]
      %v1266 = vld [vmem:[%s3 + $0x18] sm:$0xff]
      %v1267 = vld [vmem:[%s3 + $0x20] sm:$0xff]
      %v1268 = vld [vmem:[%s4] sm:$0x1]
      %v1270 = vlaneseq
      %v1271 = vshrl.u32 %v1270, 7
      %v1272 = vsub.s32 0, %v1271
      %v1273 = vrot.slane %v1268, %v1272
      %vm1275 = vcmask 326656
      %v1277 = vsel %vm1275, %v1255, 0
      %v1280 = vsel %vm1275, %v1256, 0
      %v1283 = vsel %vm1275, %v1257, 0
      %v1286 = vsel %vm1275, %v1258, 0
      %v1289 = vsel %vm1275, %v1259, 0
      %v1292 = vsel %vm1275, %v1260, 0
      %v1295 = vsel %vm1275, %v1261, 0
      %v1298 = vsel %vm1275, %v1262, 0
      %1300 = vmatprep.subr.mxu0 0.0
      %v1301 = vand.u32 %v1263, 4294901760
      %1302 = vmatpush1.msra.mxu0 %v1301
      %1303 = vmatprep.subr.mxu0 0.0
      %v1304 = vand.u32 %v1264, 4294901760
      %1305 = vmatpush1.msra.mxu0 %v1304
      %1306 = vmatprep.subr.mxu0 0.0
      %v1307 = vand.u32 %v1265, 4294901760
      %1308 = vmatpush1.msra.mxu0 %v1307
      %1309 = vmatprep.subr.mxu0 0.0
      %v1310 = vand.u32 %v1266, 4294901760
      %1311 = vmatpush1.msra.mxu0 %v1310
      %1312 = vmatprep.subr.mxu0 0.0
      %v1313 = vand.u32 %v1267, 4294901760
      %1314 = vmatpush1.msra.mxu0 %v1313
      %1315 = vmatprep.subr.mxu0 0.0
      %1316 = vmatpush1.msra.mxu0 0.0
      %1317 = vmatprep.subr.mxu0 0.0
      %1318 = vmatpush1.msra.mxu0 0.0
      %1319 = vmatprep.subr.mxu0 0.0
      %1320 = vmatpush1.msra.mxu0 0.0
      %1321 = vmatprep.subr.mxu0 0.0
      %1322 = vmatpush1.msra.mxu0 0.0
      %1323 = vmatprep.subr.mxu0 0.0
      %1324 = vmatpush1.msra.mxu0 0.0
      %1325 = vmatprep.subr.mxu0 0.0
      %1326 = vmatpush1.msra.mxu0 0.0
      %1327 = vmatprep.subr.mxu0 0.0
      %1328 = vmatpush1.msra.mxu0 0.0
      %1329 = vmatprep.subr.mxu0 0.0
      %1330 = vmatpush1.msra.mxu0 0.0
      %1331 = vmatprep.subr.mxu0 0.0
      %1332 = vmatpush1.msra.mxu0 0.0
      %1333 = vmatprep.subr.mxu0 0.0
      %1334 = vmatpush1.msra.mxu0 0.0
      %1335 = vmatprep.subr.mxu0 0.0
      %1336 = vmatpush1.msra.mxu0 0.0
      %1337 = vmatprep.subr.mxu0 0.0
      %1338 = vmatpush1.msra.mxu0 0.0
      %1339 = vmatprep.subr.mxu0 0.0
      %1340 = vmatpush1.msra.mxu0 0.0
      %1341 = vmatprep.subr.mxu0 0.0
      %1342 = vmatpush1.msra.mxu0 0.0
      %1343 = vmatprep.subr.mxu0 0.0
      %1344 = vmatpush1.msra.mxu0 0.0
      %1345 = vmatprep.subr.mxu0 0.0
      %1346 = vmatpush1.msra.mxu0 0.0
      %1347 = vmatprep.subr.mxu0 0.0
      %1348 = vmatpush1.msra.mxu0 0.0
      %1349 = vmatprep.subr.mxu0 0.0
      %1350 = vmatpush1.msra.mxu0 0.0
      %1351 = vmatprep.subr.mxu0 0.0
      %1352 = vmatpush1.msra.mxu0 0.0
      %1353 = vmatprep.subr.mxu0 0.0
      %1354 = vmatpush1.msra.mxu0 0.0
      %1355 = vmatprep.subr.mxu0 0.0
      %1356 = vmatpush1.msra.mxu0 0.0
      %1357 = vmatprep.subr.mxu0 0.0
      %1358 = vmatpush1.msra.mxu0 0.0
      %1359 = vmatprep.subr.mxu0 0.0
      %1360 = vmatpush1.msra.mxu0 0.0
      %1361 = vmatprep.subr.mxu0 0.0
      %1362 = vmatpush1.msra.mxu0 0.0
      %1363 = vmatprep.subr.mxu0 0.0
      %1364 = vmatpush1.msra.mxu0 0.0
      %1365 = vmatprep.subr.mxu0 0.0
      %1366 = vmatpush1.msra.mxu0 0.0
      %1367 = vmatprep.subr.mxu0 0.0
      %1368 = vmatpush1.msra.mxu0 0.0
      %1369 = vmatprep.mubr.f32.mxu0 0.0
      %v1370 = vand.u32 %v1277, 4294901760
      %v1371 = vsub.f32 %v1277, %v1370
      %v1372 = vand.u32 %v1371, 4294901760
      %v1373 = vsub.f32 %v1371, %v1372
      %v1374 = vand.u32 %v1373, 4294901760
      %1375 = vmatmul.mubr.f32.gmra.mrb[0].mxu0 %v1374
      %v1376 = vpop.f32.mrb[0].mxu0
      %v1377 = vadd.f32 %v1273, %v1376
      %v1378 = vpop.f32.mrb[0].mxu0
      %1379 = vmatprep.mubr.f32.mxu0 0.0
      %v1380 = vand.u32 %v1280, 4294901760
      %v1381 = vsub.f32 %v1280, %v1380
      %v1382 = vand.u32 %v1381, 4294901760
      %v1383 = vsub.f32 %v1381, %v1382
      %v1384 = vand.u32 %v1383, 4294901760
      %1385 = vmatmul.mubr.f32.gmra.mrb[0].mxu0 %v1384
      %v1386 = vpop.f32.mrb[0].mxu0
      %v1387 = vadd.f32 %v1273, %v1386
      %v1388 = vpop.f32.mrb[0].mxu0
      %1389 = vmatprep.mubr.f32.mxu0 0.0
      %v1390 = vand.u32 %v1283, 4294901760
      %v1391 = vsub.f32 %v1283, %v1390
      %v1392 = vand.u32 %v1391, 4294901760
      %v1393 = vsub.f32 %v1391, %v1392
      %v1394 = vand.u32 %v1393, 4294901760
      %1395 = vmatmul.mubr.f32.gmra.mrb[0].mxu0 %v1394
      %v1396 = vpop.f32.mrb[0].mxu0
      %v1397 = vadd.f32 %v1273, %v1396
      %v1398 = vpop.f32.mrb[0].mxu0
      %1399 = vmatprep.mubr.f32.mxu0 0.0
      %v1400 = vand.u32 %v1286, 4294901760
      %v1401 = vsub.f32 %v1286, %v1400
      %v1402 = vand.u32 %v1401, 4294901760
      %v1403 = vsub.f32 %v1401, %v1402
      %v1404 = vand.u32 %v1403, 4294901760
      %1405 = vmatmul.mubr.f32.gmra.mrb[0].mxu0 %v1404
      %v1406 = vpop.f32.mrb[0].mxu0
      %v1407 = vadd.f32 %v1273, %v1406
      %v1408 = vpop.f32.mrb[0].mxu0
      %1409 = vmatprep.mubr.f32.mxu0 0.0
      %v1410 = vand.u32 %v1289, 4294901760
      %v1411 = vsub.f32 %v1289, %v1410
      %v1412 = vand.u32 %v1411, 4294901760
      %v1413 = vsub.f32 %v1411, %v1412
      %v1414 = vand.u32 %v1413, 4294901760
      %1415 = vmatmul.mubr.f32.gmra.mrb[0].mxu0 %v1414
      %v1416 = vpop.f32.mrb[0].mxu0
      %v1417 = vadd.f32 %v1273, %v1416
      %v1418 = vpop.f32.mrb[0].mxu0
      %1419 = vmatprep.mubr.f32.mxu0 0.0
      %v1420 = vand.u32 %v1292, 4294901760
      %v1421 = vsub.f32 %v1292, %v1420
      %v1422 = vand.u32 %v1421, 4294901760
      %v1423 = vsub.f32 %v1421, %v1422
      %v1424 = vand.u32 %v1423, 4294901760
      %1425 = vmatmul.mubr.f32.gmra.mrb[0].mxu0 %v1424
      %v1426 = vpop.f32.mrb[0].mxu0
      %v1427 = vadd.f32 %v1273, %v1426
      %v1428 = vpop.f32.mrb[0].mxu0
      %1429 = vmatprep.mubr.f32.mxu0 0.0
      %v1430 = vand.u32 %v1295, 4294901760
      %v1431 = vsub.f32 %v1295, %v1430
      %v1432 = vand.u32 %v1431, 4294901760
      %v1433 = vsub.f32 %v1431, %v1432
      %v1434 = vand.u32 %v1433, 4294901760
      %1435 = vmatmul.mubr.f32.gmra.mrb[0].mxu0 %v1434
      %v1436 = vpop.f32.mrb[0].mxu0
      %v1437 = vadd.f32 %v1273, %v1436
      %v1438 = vpop.f32.mrb[0].mxu0
      %1439 = vmatprep.mubr.f32.mxu0 0.0
      %v1440 = vand.u32 %v1298, 4294901760
      %v1441 = vsub.f32 %v1298, %v1440
      %v1442 = vand.u32 %v1441, 4294901760
      %v1443 = vsub.f32 %v1441, %v1442
      %v1444 = vand.u32 %v1443, 4294901760
      %1445 = vmatmul.mubr.f32.gmra.mrb[0].mxu0 %v1444
      %v1446 = vpop.f32.mrb[0].mxu0
      %v1447 = vadd.f32 %v1273, %v1446
      %v1448 = vpop.f32.mrb[0].mxu0
      %1449 = vdwg.mxu0
      %1450 = vmatprep.subr.mxu0 0.0
      %v1451 = vand.u32 %v1263, 4294901760
      %v1452 = vsub.f32 %v1263, %v1451
      %v1453 = vand.u32 %v1452, 4294901760
      %v1454 = vsub.f32 %v1452, %v1453
      %v1455 = vand.u32 %v1454, 4294901760
      %1456 = vmatpush1.msra.mxu0 %v1455
      %1457 = vmatprep.subr.mxu0 0.0
      %v1458 = vand.u32 %v1264, 4294901760
      %v1459 = vsub.f32 %v1264, %v1458
      %v1460 = vand.u32 %v1459, 4294901760
      %v1461 = vsub.f32 %v1459, %v1460
      %v1462 = vand.u32 %v1461, 4294901760
      %1463 = vmatpush1.msra.mxu0 %v1462
      %1464 = vmatprep.subr.mxu0 0.0
      %v1465 = vand.u32 %v1265, 4294901760
      %v1466 = vsub.f32 %v1265, %v1465
      %v1467 = vand.u32 %v1466, 4294901760
      %v1468 = vsub.f32 %v1466, %v1467
      %v1469 = vand.u32 %v1468, 4294901760
      %1470 = vmatpush1.msra.mxu0 %v1469
      %1471 = vmatprep.subr.mxu0 0.0
      %v1472 = vand.u32 %v1266, 4294901760
      %v1473 = vsub.f32 %v1266, %v1472
      %v1474 = vand.u32 %v1473, 4294901760
      %v1475 = vsub.f32 %v1473, %v1474
      %v1476 = vand.u32 %v1475, 4294901760
      %1477 = vmatpush1.msra.mxu0 %v1476
      %1478 = vmatprep.subr.mxu0 0.0
      %v1479 = vand.u32 %v1267, 4294901760
      %v1480 = vsub.f32 %v1267, %v1479
      %v1481 = vand.u32 %v1480, 4294901760
      %v1482 = vsub.f32 %v1480, %v1481
      %v1483 = vand.u32 %v1482, 4294901760
      %1484 = vmatpush1.msra.mxu0 %v1483
      %1485 = vmatprep.subr.mxu0 0.0
      %1486 = vmatpush1.msra.mxu0 0.0
      %1487 = vmatprep.subr.mxu0 0.0
      %1488 = vmatpush1.msra.mxu0 0.0
      %1489 = vmatprep.subr.mxu0 0.0
      %1490 = vmatpush1.msra.mxu0 0.0
      %1491 = vmatprep.subr.mxu0 0.0
      %1492 = vmatpush1.msra.mxu0 0.0
      %1493 = vmatprep.subr.mxu0 0.0
      %1494 = vmatpush1.msra.mxu0 0.0
      %1495 = vmatprep.subr.mxu0 0.0
      %1496 = vmatpush1.msra.mxu0 0.0
      %1497 = vmatprep.subr.mxu0 0.0
      %1498 = vmatpush1.msra.mxu0 0.0
      %1499 = vmatprep.subr.mxu0 0.0
      %1500 = vmatpush1.msra.mxu0 0.0
      %1501 = vmatprep.subr.mxu0 0.0
      %1502 = vmatpush1.msra.mxu0 0.0
      %1503 = vmatprep.subr.mxu0 0.0
      %1504 = vmatpush1.msra.mxu0 0.0
      %1505 = vmatprep.subr.mxu0 0.0
      %1506 = vmatpush1.msra.mxu0 0.0
      %1507 = vmatprep.subr.mxu0 0.0
      %1508 = vmatpush1.msra.mxu0 0.0
      %1509 = vmatprep.subr.mxu0 0.0
      %1510 = vmatpush1.msra.mxu0 0.0
      %1511 = vmatprep.subr.mxu0 0.0
      %1512 = vmatpush1.msra.mxu0 0.0
      %1513 = vmatprep.subr.mxu0 0.0
      %1514 = vmatpush1.msra.mxu0 0.0
      %1515 = vmatprep.subr.mxu0 0.0
      %1516 = vmatpush1.msra.mxu0 0.0
      %1517 = vmatprep.subr.mxu0 0.0
      %1518 = vmatpush1.msra.mxu0 0.0
      %1519 = vmatprep.subr.mxu0 0.0
      %1520 = vmatpush1.msra.mxu0 0.0
      %1521 = vmatprep.subr.mxu0 0.0
      %1522 = vmatpush1.msra.mxu0 0.0
      %1523 = vmatprep.subr.mxu0 0.0
      %1524 = vmatpush1.msra.mxu0 0.0
      %1525 = vmatprep.subr.mxu0 0.0
      %1526 = vmatpush1.msra.mxu0 0.0
      %1527 = vmatprep.subr.mxu0 0.0
      %1528 = vmatpush1.msra.mxu0 0.0
      %1529 = vmatprep.subr.mxu0 0.0
      %1530 = vmatpush1.msra.mxu0 0.0
      %1531 = vmatprep.subr.mxu0 0.0
      %1532 = vmatpush1.msra.mxu0 0.0
      %1533 = vmatprep.subr.mxu0 0.0
      %1534 = vmatpush1.msra.mxu0 0.0
      %1535 = vmatprep.subr.mxu0 0.0
      %1536 = vmatpush1.msra.mxu0 0.0
      %1537 = vmatprep.subr.mxu0 0.0
      %1538 = vmatpush1.msra.mxu0 0.0
      %1539 = vmatprep.mubr.f32.mxu0 0.0
      %v1540 = vand.u32 %v1277, 4294901760
      %1541 = vmatmul.mubr.f32.gmra.mrb[0].mxu0 %v1540
      %v1542 = vpop.f32.mrb[0].mxu0
      %v1543 = vadd.f32 %v1377, %v1542
      %v1544 = vpop.f32.mrb[0].mxu0
      %1545 = vmatprep.mubr.f32.mxu0 0.0
      %v1546 = vand.u32 %v1280, 4294901760
      %1547 = vmatmul.mubr.f32.gmra.mrb[0].mxu0 %v1546
      %v1548 = vpop.f32.mrb[0].mxu0
      %v1549 = vadd.f32 %v1387, %v1548
      %v1550 = vpop.f32.mrb[0].mxu0
      %1551 = vmatprep.mubr.f32.mxu0 0.0
      %v1552 = vand.u32 %v1283, 4294901760
      %1553 = vmatmul.mubr.f32.gmra.mrb[0].mxu0 %v1552
      %v1554 = vpop.f32.mrb[0].mxu0
      %v1555 = vadd.f32 %v1397, %v1554
      %v1556 = vpop.f32.mrb[0].mxu0
      %1557 = vmatprep.mubr.f32.mxu0 0.0
      %v1558 = vand.u32 %v1286, 4294901760
      %1559 = vmatmul.mubr.f32.gmra.mrb[0].mxu0 %v1558
      %v1560 = vpop.f32.mrb[0].mxu0
      %v1561 = vadd.f32 %v1407, %v1560
      %v1562 = vpop.f32.mrb[0].mxu0
      %1563 = vmatprep.mubr.f32.mxu0 0.0
      %v1564 = vand.u32 %v1289, 4294901760
      %1565 = vmatmul.mubr.f32.gmra.mrb[0].mxu0 %v1564
      %v1566 = vpop.f32.mrb[0].mxu0
      %v1567 = vadd.f32 %v1417, %v1566
      %v1568 = vpop.f32.mrb[0].mxu0
      %1569 = vmatprep.mubr.f32.mxu0 0.0
      %v1570 = vand.u32 %v1292, 4294901760
      %1571 = vmatmul.mubr.f32.gmra.mrb[0].mxu0 %v1570
      %v1572 = vpop.f32.mrb[0].mxu0
      %v1573 = vadd.f32 %v1427, %v1572
      %v1574 = vpop.f32.mrb[0].mxu0
      %1575 = vmatprep.mubr.f32.mxu0 0.0
      %v1576 = vand.u32 %v1295, 4294901760
      %1577 = vmatmul.mubr.f32.gmra.mrb[0].mxu0 %v1576
      %v1578 = vpop.f32.mrb[0].mxu0
      %v1579 = vadd.f32 %v1437, %v1578
      %v1580 = vpop.f32.mrb[0].mxu0
      %1581 = vmatprep.mubr.f32.mxu0 0.0
      %v1582 = vand.u32 %v1298, 4294901760
      %1583 = vmatmul.mubr.f32.gmra.mrb[0].mxu0 %v1582
      %v1584 = vpop.f32.mrb[0].mxu0
      %v1585 = vadd.f32 %v1447, %v1584
      %v1586 = vpop.f32.mrb[0].mxu0
      %1587 = vdwg.mxu0
      %1588 = vmatprep.subr.mxu0 0.0
      %v1589 = vand.u32 %v1263, 4294901760
      %v1590 = vsub.f32 %v1263, %v1589
      %1591 = vmatpush1.msra.mxu0 %v1590
      %1592 = vmatprep.subr.mxu0 0.0
      %v1593 = vand.u32 %v1264, 4294901760
      %v1594 = vsub.f32 %v1264, %v1593
      %1595 = vmatpush1.msra.mxu0 %v1594
      %1596 = vmatprep.subr.mxu0 0.0
      %v1597 = vand.u32 %v1265, 4294901760
      %v1598 = vsub.f32 %v1265, %v1597
      %1599 = vmatpush1.msra.mxu0 %v1598
      %1600 = vmatprep.subr.mxu0 0.0
      %v1601 = vand.u32 %v1266, 4294901760
      %v1602 = vsub.f32 %v1266, %v1601
      %1603 = vmatpush1.msra.mxu0 %v1602
      %1604 = vmatprep.subr.mxu0 0.0
      %v1605 = vand.u32 %v1267, 4294901760
      %v1606 = vsub.f32 %v1267, %v1605
      %1607 = vmatpush1.msra.mxu0 %v1606
      %1608 = vmatprep.subr.mxu0 0.0
      %1609 = vmatpush1.msra.mxu0 0.0
      %1610 = vmatprep.subr.mxu0 0.0
      %1611 = vmatpush1.msra.mxu0 0.0
      %1612 = vmatprep.subr.mxu0 0.0
      %1613 = vmatpush1.msra.mxu0 0.0
      %1614 = vmatprep.subr.mxu0 0.0
      %1615 = vmatpush1.msra.mxu0 0.0
      %1616 = vmatprep.subr.mxu0 0.0
      %1617 = vmatpush1.msra.mxu0 0.0
      %1618 = vmatprep.subr.mxu0 0.0
      %1619 = vmatpush1.msra.mxu0 0.0
      %1620 = vmatprep.subr.mxu0 0.0
      %1621 = vmatpush1.msra.mxu0 0.0
      %1622 = vmatprep.subr.mxu0 0.0
      %1623 = vmatpush1.msra.mxu0 0.0
      %1624 = vmatprep.subr.mxu0 0.0
      %1625 = vmatpush1.msra.mxu0 0.0
      %1626 = vmatprep.subr.mxu0 0.0
      %1627 = vmatpush1.msra.mxu0 0.0
      %1628 = vmatprep.subr.mxu0 0.0
      %1629 = vmatpush1.msra.mxu0 0.0
      %1630 = vmatprep.subr.mxu0 0.0
      %1631 = vmatpush1.msra.mxu0 0.0
      %1632 = vmatprep.subr.mxu0 0.0
      %1633 = vmatpush1.msra.mxu0 0.0
      %1634 = vmatprep.subr.mxu0 0.0
      %1635 = vmatpush1.msra.mxu0 0.0
      %1636 = vmatprep.subr.mxu0 0.0
      %1637 = vmatpush1.msra.mxu0 0.0
      %1638 = vmatprep.subr.mxu0 0.0
      %1639 = vmatpush1.msra.mxu0 0.0
      %1640 = vmatprep.subr.mxu0 0.0
      %1641 = vmatpush1.msra.mxu0 0.0
      %1642 = vmatprep.subr.mxu0 0.0
      %1643 = vmatpush1.msra.mxu0 0.0
      %1644 = vmatprep.subr.mxu0 0.0
      %1645 = vmatpush1.msra.mxu0 0.0
      %1646 = vmatprep.subr.mxu0 0.0
      %1647 = vmatpush1.msra.mxu0 0.0
      %1648 = vmatprep.subr.mxu0 0.0
      %1649 = vmatpush1.msra.mxu0 0.0
      %1650 = vmatprep.subr.mxu0 0.0
      %1651 = vmatpush1.msra.mxu0 0.0
      %1652 = vmatprep.subr.mxu0 0.0
      %1653 = vmatpush1.msra.mxu0 0.0
      %1654 = vmatprep.subr.mxu0 0.0
      %1655 = vmatpush1.msra.mxu0 0.0
      %1656 = vmatprep.subr.mxu0 0.0
      %1657 = vmatpush1.msra.mxu0 0.0
      %1658 = vmatprep.subr.mxu0 0.0
      %1659 = vmatpush1.msra.mxu0 0.0
      %1660 = vmatprep.subr.mxu0 0.0
      %1661 = vmatpush1.msra.mxu0 0.0
      %1662 = vmatprep.mubr.f32.mxu0 0.0
      %v1663 = vand.u32 %v1277, 4294901760
      %v1664 = vsub.f32 %v1277, %v1663
      %1665 = vmatmul.mubr.f32.gmra.mrb[0].mxu0 %v1664
      %v1666 = vpop.f32.mrb[0].mxu0
      %v1667 = vadd.f32 %v1543, %v1666
      %v1668 = vpop.f32.mrb[0].mxu0
      %1669 = vmatprep.mubr.f32.mxu0 0.0
      %v1670 = vand.u32 %v1280, 4294901760
      %v1671 = vsub.f32 %v1280, %v1670
      %1672 = vmatmul.mubr.f32.gmra.mrb[0].mxu0 %v1671
      %v1673 = vpop.f32.mrb[0].mxu0
      %v1674 = vadd.f32 %v1549, %v1673
      %v1675 = vpop.f32.mrb[0].mxu0
      %1676 = vmatprep.mubr.f32.mxu0 0.0
      %v1677 = vand.u32 %v1283, 4294901760
      %v1678 = vsub.f32 %v1283, %v1677
      %1679 = vmatmul.mubr.f32.gmra.mrb[0].mxu0 %v1678
      %v1680 = vpop.f32.mrb[0].mxu0
      %v1681 = vadd.f32 %v1555, %v1680
      %v1682 = vpop.f32.mrb[0].mxu0
      %1683 = vmatprep.mubr.f32.mxu0 0.0
      %v1684 = vand.u32 %v1286, 4294901760
      %v1685 = vsub.f32 %v1286, %v1684
      %1686 = vmatmul.mubr.f32.gmra.mrb[0].mxu0 %v1685
      %v1687 = vpop.f32.mrb[0].mxu0
      %v1688 = vadd.f32 %v1561, %v1687
      %v1689 = vpop.f32.mrb[0].mxu0
      %1690 = vmatprep.mubr.f32.mxu0 0.0
      %v1691 = vand.u32 %v1289, 4294901760
      %v1692 = vsub.f32 %v1289, %v1691
      %1693 = vmatmul.mubr.f32.gmra.mrb[0].mxu0 %v1692
      %v1694 = vpop.f32.mrb[0].mxu0
      %v1695 = vadd.f32 %v1567, %v1694
      %v1696 = vpop.f32.mrb[0].mxu0
      %1697 = vmatprep.mubr.f32.mxu0 0.0
      %v1698 = vand.u32 %v1292, 4294901760
      %v1699 = vsub.f32 %v1292, %v1698
      %1700 = vmatmul.mubr.f32.gmra.mrb[0].mxu0 %v1699
      %v1701 = vpop.f32.mrb[0].mxu0
      %v1702 = vadd.f32 %v1573, %v1701
      %v1703 = vpop.f32.mrb[0].mxu0
      %1704 = vmatprep.mubr.f32.mxu0 0.0
      %v1705 = vand.u32 %v1295, 4294901760
      %v1706 = vsub.f32 %v1295, %v1705
      %1707 = vmatmul.mubr.f32.gmra.mrb[0].mxu0 %v1706
      %v1708 = vpop.f32.mrb[0].mxu0
      %v1709 = vadd.f32 %v1579, %v1708
      %v1710 = vpop.f32.mrb[0].mxu0
      %1711 = vmatprep.mubr.f32.mxu0 0.0
      %v1712 = vand.u32 %v1298, 4294901760
      %v1713 = vsub.f32 %v1298, %v1712
      %1714 = vmatmul.mubr.f32.gmra.mrb[0].mxu0 %v1713
      %v1715 = vpop.f32.mrb[0].mxu0
      %v1716 = vadd.f32 %v1585, %v1715
      %v1717 = vpop.f32.mrb[0].mxu0
      %1718 = vdwg.mxu0
      %1719 = vmatprep.subr.mxu0 0.0
      %v1720 = vand.u32 %v1263, 4294901760
      %1721 = vmatpush1.msra.mxu0 %v1720
      %1722 = vmatprep.subr.mxu0 0.0
      %v1723 = vand.u32 %v1264, 4294901760
      %1724 = vmatpush1.msra.mxu0 %v1723
      %1725 = vmatprep.subr.mxu0 0.0
      %v1726 = vand.u32 %v1265, 4294901760
      %1727 = vmatpush1.msra.mxu0 %v1726
      %1728 = vmatprep.subr.mxu0 0.0
      %v1729 = vand.u32 %v1266, 4294901760
      %1730 = vmatpush1.msra.mxu0 %v1729
      %1731 = vmatprep.subr.mxu0 0.0
      %v1732 = vand.u32 %v1267, 4294901760
      %1733 = vmatpush1.msra.mxu0 %v1732
      %1734 = vmatprep.subr.mxu0 0.0
      %1735 = vmatpush1.msra.mxu0 0.0
      %1736 = vmatprep.subr.mxu0 0.0
      %1737 = vmatpush1.msra.mxu0 0.0
      %1738 = vmatprep.subr.mxu0 0.0
      %1739 = vmatpush1.msra.mxu0 0.0
      %1740 = vmatprep.subr.mxu0 0.0
      %1741 = vmatpush1.msra.mxu0 0.0
      %1742 = vmatprep.subr.mxu0 0.0
      %1743 = vmatpush1.msra.mxu0 0.0
      %1744 = vmatprep.subr.mxu0 0.0
      %1745 = vmatpush1.msra.mxu0 0.0
      %1746 = vmatprep.subr.mxu0 0.0
      %1747 = vmatpush1.msra.mxu0 0.0
      %1748 = vmatprep.subr.mxu0 0.0
      %1749 = vmatpush1.msra.mxu0 0.0
      %1750 = vmatprep.subr.mxu0 0.0
      %1751 = vmatpush1.msra.mxu0 0.0
      %1752 = vmatprep.subr.mxu0 0.0
      %1753 = vmatpush1.msra.mxu0 0.0
      %1754 = vmatprep.subr.mxu0 0.0
      %1755 = vmatpush1.msra.mxu0 0.0
      %1756 = vmatprep.subr.mxu0 0.0
      %1757 = vmatpush1.msra.mxu0 0.0
      %1758 = vmatprep.subr.mxu0 0.0
      %1759 = vmatpush1.msra.mxu0 0.0
      %1760 = vmatprep.subr.mxu0 0.0
      %1761 = vmatpush1.msra.mxu0 0.0
      %1762 = vmatprep.subr.mxu0 0.0
      %1763 = vmatpush1.msra.mxu0 0.0
      %1764 = vmatprep.subr.mxu0 0.0
      %1765 = vmatpush1.msra.mxu0 0.0
      %1766 = vmatprep.subr.mxu0 0.0
      %1767 = vmatpush1.msra.mxu0 0.0
      %1768 = vmatprep.subr.mxu0 0.0
      %1769 = vmatpush1.msra.mxu0 0.0
      %1770 = vmatprep.subr.mxu0 0.0
      %1771 = vmatpush1.msra.mxu0 0.0
      %1772 = vmatprep.subr.mxu0 0.0
      %1773 = vmatpush1.msra.mxu0 0.0
      %1774 = vmatprep.subr.mxu0 0.0
      %1775 = vmatpush1.msra.mxu0 0.0
      %1776 = vmatprep.subr.mxu0 0.0
      %1777 = vmatpush1.msra.mxu0 0.0
      %1778 = vmatprep.subr.mxu0 0.0
      %1779 = vmatpush1.msra.mxu0 0.0
      %1780 = vmatprep.subr.mxu0 0.0
      %1781 = vmatpush1.msra.mxu0 0.0
      %1782 = vmatprep.subr.mxu0 0.0
      %1783 = vmatpush1.msra.mxu0 0.0
      %1784 = vmatprep.subr.mxu0 0.0
      %1785 = vmatpush1.msra.mxu0 0.0
      %1786 = vmatprep.subr.mxu0 0.0
      %1787 = vmatpush1.msra.mxu0 0.0
      %1788 = vmatprep.mubr.f32.mxu0 0.0
      %v1789 = vand.u32 %v1277, 4294901760
      %v1790 = vsub.f32 %v1277, %v1789
      %v1791 = vand.u32 %v1790, 4294901760
      %1792 = vmatmul.mubr.f32.gmra.mrb[0].mxu0 %v1791
      %v1793 = vpop.f32.mrb[0].mxu0
      %v1794 = vadd.f32 %v1667, %v1793
      %v1795 = vpop.f32.mrb[0].mxu0
      %1796 = vmatprep.mubr.f32.mxu0 0.0
      %v1797 = vand.u32 %v1280, 4294901760
      %v1798 = vsub.f32 %v1280, %v1797
      %v1799 = vand.u32 %v1798, 4294901760
      %1800 = vmatmul.mubr.f32.gmra.mrb[0].mxu0 %v1799
      %v1801 = vpop.f32.mrb[0].mxu0
      %v1802 = vadd.f32 %v1674, %v1801
      %v1803 = vpop.f32.mrb[0].mxu0
      %1804 = vmatprep.mubr.f32.mxu0 0.0
      %v1805 = vand.u32 %v1283, 4294901760
      %v1806 = vsub.f32 %v1283, %v1805
      %v1807 = vand.u32 %v1806, 4294901760
      %1808 = vmatmul.mubr.f32.gmra.mrb[0].mxu0 %v1807
      %v1809 = vpop.f32.mrb[0].mxu0
      %v1810 = vadd.f32 %v1681, %v1809
      %v1811 = vpop.f32.mrb[0].mxu0
      %1812 = vmatprep.mubr.f32.mxu0 0.0
      %v1813 = vand.u32 %v1286, 4294901760
      %v1814 = vsub.f32 %v1286, %v1813
      %v1815 = vand.u32 %v1814, 4294901760
      %1816 = vmatmul.mubr.f32.gmra.mrb[0].mxu0 %v1815
      %v1817 = vpop.f32.mrb[0].mxu0
      %v1818 = vadd.f32 %v1688, %v1817
      %v1819 = vpop.f32.mrb[0].mxu0
      %1820 = vmatprep.mubr.f32.mxu0 0.0
      %v1821 = vand.u32 %v1289, 4294901760
      %v1822 = vsub.f32 %v1289, %v1821
      %v1823 = vand.u32 %v1822, 4294901760
      %1824 = vmatmul.mubr.f32.gmra.mrb[0].mxu0 %v1823
      %v1825 = vpop.f32.mrb[0].mxu0
      %v1826 = vadd.f32 %v1695, %v1825
      %v1827 = vpop.f32.mrb[0].mxu0
      %1828 = vmatprep.mubr.f32.mxu0 0.0
      %v1829 = vand.u32 %v1292, 4294901760
      %v1830 = vsub.f32 %v1292, %v1829
      %v1831 = vand.u32 %v1830, 4294901760
      %1832 = vmatmul.mubr.f32.gmra.mrb[0].mxu0 %v1831
      %v1833 = vpop.f32.mrb[0].mxu0
      %v1834 = vadd.f32 %v1702, %v1833
      %v1835 = vpop.f32.mrb[0].mxu0
      %1836 = vmatprep.mubr.f32.mxu0 0.0
      %v1837 = vand.u32 %v1295, 4294901760
      %v1838 = vsub.f32 %v1295, %v1837
      %v1839 = vand.u32 %v1838, 4294901760
      %1840 = vmatmul.mubr.f32.gmra.mrb[0].mxu0 %v1839
      %v1841 = vpop.f32.mrb[0].mxu0
      %v1842 = vadd.f32 %v1709, %v1841
      %v1843 = vpop.f32.mrb[0].mxu0
      %1844 = vmatprep.mubr.f32.mxu0 0.0
      %v1845 = vand.u32 %v1298, 4294901760
      %v1846 = vsub.f32 %v1298, %v1845
      %v1847 = vand.u32 %v1846, 4294901760
      %1848 = vmatmul.mubr.f32.gmra.mrb[0].mxu0 %v1847
      %v1849 = vpop.f32.mrb[0].mxu0
      %v1850 = vadd.f32 %v1716, %v1849
      %v1851 = vpop.f32.mrb[0].mxu0
      %1852 = vdwg.mxu0
      %1853 = vmatprep.subr.mxu0 0.0
      %v1854 = vand.u32 %v1263, 4294901760
      %v1855 = vsub.f32 %v1263, %v1854
      %v1856 = vand.u32 %v1855, 4294901760
      %1857 = vmatpush1.msra.mxu0 %v1856
      %1858 = vmatprep.subr.mxu0 0.0
      %v1859 = vand.u32 %v1264, 4294901760
      %v1860 = vsub.f32 %v1264, %v1859
      %v1861 = vand.u32 %v1860, 4294901760
      %1862 = vmatpush1.msra.mxu0 %v1861
      %1863 = vmatprep.subr.mxu0 0.0
      %v1864 = vand.u32 %v1265, 4294901760
      %v1865 = vsub.f32 %v1265, %v1864
      %v1866 = vand.u32 %v1865, 4294901760
      %1867 = vmatpush1.msra.mxu0 %v1866
      %1868 = vmatprep.subr.mxu0 0.0
      %v1869 = vand.u32 %v1266, 4294901760
      %v1870 = vsub.f32 %v1266, %v1869
      %v1871 = vand.u32 %v1870, 4294901760
      %1872 = vmatpush1.msra.mxu0 %v1871
      %1873 = vmatprep.subr.mxu0 0.0
      %v1874 = vand.u32 %v1267, 4294901760
      %v1875 = vsub.f32 %v1267, %v1874
      %v1876 = vand.u32 %v1875, 4294901760
      %1877 = vmatpush1.msra.mxu0 %v1876
      %1878 = vmatprep.subr.mxu0 0.0
      %1879 = vmatpush1.msra.mxu0 0.0
      %1880 = vmatprep.subr.mxu0 0.0
      %1881 = vmatpush1.msra.mxu0 0.0
      %1882 = vmatprep.subr.mxu0 0.0
      %1883 = vmatpush1.msra.mxu0 0.0
      %1884 = vmatprep.subr.mxu0 0.0
      %1885 = vmatpush1.msra.mxu0 0.0
      %1886 = vmatprep.subr.mxu0 0.0
      %1887 = vmatpush1.msra.mxu0 0.0
      %1888 = vmatprep.subr.mxu0 0.0
      %1889 = vmatpush1.msra.mxu0 0.0
      %1890 = vmatprep.subr.mxu0 0.0
      %1891 = vmatpush1.msra.mxu0 0.0
      %1892 = vmatprep.subr.mxu0 0.0
      %1893 = vmatpush1.msra.mxu0 0.0
      %1894 = vmatprep.subr.mxu0 0.0
      %1895 = vmatpush1.msra.mxu0 0.0
      %1896 = vmatprep.subr.mxu0 0.0
      %1897 = vmatpush1.msra.mxu0 0.0
      %1898 = vmatprep.subr.mxu0 0.0
      %1899 = vmatpush1.msra.mxu0 0.0
      %1900 = vmatprep.subr.mxu0 0.0
      %1901 = vmatpush1.msra.mxu0 0.0
      %1902 = vmatprep.subr.mxu0 0.0
      %1903 = vmatpush1.msra.mxu0 0.0
      %1904 = vmatprep.subr.mxu0 0.0
      %1905 = vmatpush1.msra.mxu0 0.0
      %1906 = vmatprep.subr.mxu0 0.0
      %1907 = vmatpush1.msra.mxu0 0.0
      %1908 = vmatprep.subr.mxu0 0.0
      %1909 = vmatpush1.msra.mxu0 0.0
      %1910 = vmatprep.subr.mxu0 0.0
      %1911 = vmatpush1.msra.mxu0 0.0
      %1912 = vmatprep.subr.mxu0 0.0
      %1913 = vmatpush1.msra.mxu0 0.0
      %1914 = vmatprep.subr.mxu0 0.0
      %1915 = vmatpush1.msra.mxu0 0.0
      %1916 = vmatprep.subr.mxu0 0.0
      %1917 = vmatpush1.msra.mxu0 0.0
      %1918 = vmatprep.subr.mxu0 0.0
      %1919 = vmatpush1.msra.mxu0 0.0
      %1920 = vmatprep.subr.mxu0 0.0
      %1921 = vmatpush1.msra.mxu0 0.0
      %1922 = vmatprep.subr.mxu0 0.0
      %1923 = vmatpush1.msra.mxu0 0.0
      %1924 = vmatprep.subr.mxu0 0.0
      %1925 = vmatpush1.msra.mxu0 0.0
      %1926 = vmatprep.subr.mxu0 0.0
      %1927 = vmatpush1.msra.mxu0 0.0
      %1928 = vmatprep.subr.mxu0 0.0
      %1929 = vmatpush1.msra.mxu0 0.0
      %1930 = vmatprep.subr.mxu0 0.0
      %1931 = vmatpush1.msra.mxu0 0.0
      %1932 = vmatprep.mubr.f32.mxu0 0.0
      %v1933 = vand.u32 %v1277, 4294901760
      %1934 = vmatmul.mubr.f32.gmra.mrb[0].mxu0 %v1933
      %v1935 = vpop.f32.mrb[0].mxu0
      %v1936 = vadd.f32 %v1794, %v1935
      %v1937 = vpop.f32.mrb[0].mxu0
      %1938 = vmatprep.mubr.f32.mxu0 0.0
      %v1939 = vand.u32 %v1280, 4294901760
      %1940 = vmatmul.mubr.f32.gmra.mrb[0].mxu0 %v1939
      %v1941 = vpop.f32.mrb[0].mxu0
      %v1942 = vadd.f32 %v1802, %v1941
      %v1943 = vpop.f32.mrb[0].mxu0
      %1944 = vmatprep.mubr.f32.mxu0 0.0
      %v1945 = vand.u32 %v1283, 4294901760
      %1946 = vmatmul.mubr.f32.gmra.mrb[0].mxu0 %v1945
      %v1947 = vpop.f32.mrb[0].mxu0
      %v1948 = vadd.f32 %v1810, %v1947
      %v1949 = vpop.f32.mrb[0].mxu0
      %1950 = vmatprep.mubr.f32.mxu0 0.0
      %v1951 = vand.u32 %v1286, 4294901760
      %1952 = vmatmul.mubr.f32.gmra.mrb[0].mxu0 %v1951
      %v1953 = vpop.f32.mrb[0].mxu0
      %v1954 = vadd.f32 %v1818, %v1953
      %v1955 = vpop.f32.mrb[0].mxu0
      %1956 = vmatprep.mubr.f32.mxu0 0.0
      %v1957 = vand.u32 %v1289, 4294901760
      %1958 = vmatmul.mubr.f32.gmra.mrb[0].mxu0 %v1957
      %v1959 = vpop.f32.mrb[0].mxu0
      %v1960 = vadd.f32 %v1826, %v1959
      %v1961 = vpop.f32.mrb[0].mxu0
      %1962 = vmatprep.mubr.f32.mxu0 0.0
      %v1963 = vand.u32 %v1292, 4294901760
      %1964 = vmatmul.mubr.f32.gmra.mrb[0].mxu0 %v1963
      %v1965 = vpop.f32.mrb[0].mxu0
      %v1966 = vadd.f32 %v1834, %v1965
      %v1967 = vpop.f32.mrb[0].mxu0
      %1968 = vmatprep.mubr.f32.mxu0 0.0
      %v1969 = vand.u32 %v1295, 4294901760
      %1970 = vmatmul.mubr.f32.gmra.mrb[0].mxu0 %v1969
      %v1971 = vpop.f32.mrb[0].mxu0
      %v1972 = vadd.f32 %v1842, %v1971
      %v1973 = vpop.f32.mrb[0].mxu0
      %1974 = vmatprep.mubr.f32.mxu0 0.0
      %v1975 = vand.u32 %v1298, 4294901760
      %1976 = vmatmul.mubr.f32.gmra.mrb[0].mxu0 %v1975
      %v1977 = vpop.f32.mrb[0].mxu0
      %v1978 = vadd.f32 %v1850, %v1977
      %v1979 = vpop.f32.mrb[0].mxu0
      %1980 = vdwg.mxu0
      %1981 = vmatprep.subr.mxu0 0.0
      %v1982 = vand.u32 %v1263, 4294901760
      %1983 = vmatpush1.msra.mxu0 %v1982
      %1984 = vmatprep.subr.mxu0 0.0
      %v1985 = vand.u32 %v1264, 4294901760
      %1986 = vmatpush1.msra.mxu0 %v1985
      %1987 = vmatprep.subr.mxu0 0.0
      %v1988 = vand.u32 %v1265, 4294901760
      %1989 = vmatpush1.msra.mxu0 %v1988
      %1990 = vmatprep.subr.mxu0 0.0
      %v1991 = vand.u32 %v1266, 4294901760
      %1992 = vmatpush1.msra.mxu0 %v1991
      %1993 = vmatprep.subr.mxu0 0.0
      %v1994 = vand.u32 %v1267, 4294901760
      %1995 = vmatpush1.msra.mxu0 %v1994
      %1996 = vmatprep.subr.mxu0 0.0
      %1997 = vmatpush1.msra.mxu0 0.0
      %1998 = vmatprep.subr.mxu0 0.0
      %1999 = vmatpush1.msra.mxu0 0.0
      %2000 = vmatprep.subr.mxu0 0.0
      %2001 = vmatpush1.msra.mxu0 0.0
      %2002 = vmatprep.subr.mxu0 0.0
      %2003 = vmatpush1.msra.mxu0 0.0
      %2004 = vmatprep.subr.mxu0 0.0
      %2005 = vmatpush1.msra.mxu0 0.0
      %2006 = vmatprep.subr.mxu0 0.0
      %2007 = vmatpush1.msra.mxu0 0.0
      %2008 = vmatprep.subr.mxu0 0.0
      %2009 = vmatpush1.msra.mxu0 0.0
      %2010 = vmatprep.subr.mxu0 0.0
      %2011 = vmatpush1.msra.mxu0 0.0
      %2012 = vmatprep.subr.mxu0 0.0
      %2013 = vmatpush1.msra.mxu0 0.0
      %2014 = vmatprep.subr.mxu0 0.0
      %2015 = vmatpush1.msra.mxu0 0.0
      %2016 = vmatprep.subr.mxu0 0.0
      %2017 = vmatpush1.msra.mxu0 0.0
      %2018 = vmatprep.subr.mxu0 0.0
      %2019 = vmatpush1.msra.mxu0 0.0
      %2020 = vmatprep.subr.mxu0 0.0
      %2021 = vmatpush1.msra.mxu0 0.0
      %2022 = vmatprep.subr.mxu0 0.0
      %2023 = vmatpush1.msra.mxu0 0.0
      %2024 = vmatprep.subr.mxu0 0.0
      %2025 = vmatpush1.msra.mxu0 0.0
      %2026 = vmatprep.subr.mxu0 0.0
      %2027 = vmatpush1.msra.mxu0 0.0
      %2028 = vmatprep.subr.mxu0 0.0
      %2029 = vmatpush1.msra.mxu0 0.0
      %2030 = vmatprep.subr.mxu0 0.0
      %2031 = vmatpush1.msra.mxu0 0.0
      %2032 = vmatprep.subr.mxu0 0.0
      %2033 = vmatpush1.msra.mxu0 0.0
      %2034 = vmatprep.subr.mxu0 0.0
      %2035 = vmatpush1.msra.mxu0 0.0
      %2036 = vmatprep.subr.mxu0 0.0
      %2037 = vmatpush1.msra.mxu0 0.0
      %2038 = vmatprep.subr.mxu0 0.0
      %2039 = vmatpush1.msra.mxu0 0.0
      %2040 = vmatprep.subr.mxu0 0.0
      %2041 = vmatpush1.msra.mxu0 0.0
      %2042 = vmatprep.subr.mxu0 0.0
      %2043 = vmatpush1.msra.mxu0 0.0
      %2044 = vmatprep.subr.mxu0 0.0
      %2045 = vmatpush1.msra.mxu0 0.0
      %2046 = vmatprep.subr.mxu0 0.0
      %2047 = vmatpush1.msra.mxu0 0.0
      %2048 = vmatprep.subr.mxu0 0.0
      %2049 = vmatpush1.msra.mxu0 0.0
      %2050 = vmatprep.mubr.f32.mxu0 0.0
      %v2051 = vand.u32 %v1277, 4294901760
      %2052 = vmatmul.mubr.f32.gmra.mrb[0].mxu0 %v2051
      %v2053 = vpop.f32.mrb[0].mxu0
      %v2054 = vadd.f32 %v1936, %v2053
      %v2055 = vpop.f32.mrb[0].mxu0
      %2056 = vmatprep.mubr.f32.mxu0 0.0
      %v2057 = vand.u32 %v1280, 4294901760
      %2058 = vmatmul.mubr.f32.gmra.mrb[0].mxu0 %v2057
      %v2059 = vpop.f32.mrb[0].mxu0
      %v2060 = vadd.f32 %v1942, %v2059
      %v2061 = vpop.f32.mrb[0].mxu0
      %2062 = vmatprep.mubr.f32.mxu0 0.0
      %v2063 = vand.u32 %v1283, 4294901760
      %2064 = vmatmul.mubr.f32.gmra.mrb[0].mxu0 %v2063
      %v2065 = vpop.f32.mrb[0].mxu0
      %v2066 = vadd.f32 %v1948, %v2065
      %v2067 = vpop.f32.mrb[0].mxu0
      %2068 = vmatprep.mubr.f32.mxu0 0.0
      %v2069 = vand.u32 %v1286, 4294901760
      %2070 = vmatmul.mubr.f32.gmra.mrb[0].mxu0 %v2069
      %v2071 = vpop.f32.mrb[0].mxu0
      %v2072 = vadd.f32 %v1954, %v2071
      %v2073 = vpop.f32.mrb[0].mxu0
      %2074 = vmatprep.mubr.f32.mxu0 0.0
      %v2075 = vand.u32 %v1289, 4294901760
      %2076 = vmatmul.mubr.f32.gmra.mrb[0].mxu0 %v2075
      %v2077 = vpop.f32.mrb[0].mxu0
      %v2078 = vadd.f32 %v1960, %v2077
      %v2079 = vpop.f32.mrb[0].mxu0
      %2080 = vmatprep.mubr.f32.mxu0 0.0
      %v2081 = vand.u32 %v1292, 4294901760
      %2082 = vmatmul.mubr.f32.gmra.mrb[0].mxu0 %v2081
      %v2083 = vpop.f32.mrb[0].mxu0
      %v2084 = vadd.f32 %v1966, %v2083
      %v2085 = vpop.f32.mrb[0].mxu0
      %2086 = vmatprep.mubr.f32.mxu0 0.0
      %v2087 = vand.u32 %v1295, 4294901760
      %2088 = vmatmul.mubr.f32.gmra.mrb[0].mxu0 %v2087
      %v2089 = vpop.f32.mrb[0].mxu0
      %v2090 = vadd.f32 %v1972, %v2089
      %v2091 = vpop.f32.mrb[0].mxu0
      %2092 = vmatprep.mubr.f32.mxu0 0.0
      %v2093 = vand.u32 %v1298, 4294901760
      %2094 = vmatmul.mubr.f32.gmra.mrb[0].mxu0 %v2093
      %v2095 = vpop.f32.mrb[0].mxu0
      %v2096 = vadd.f32 %v1978, %v2095
      %v2097 = vpop.f32.mrb[0].mxu0
      %2098 = vdwg.mxu0
      %v2099 = vmax.f32 %v2054, 0.0
      %v2100 = vmax.f32 %v2060, 0.0
      %v2101 = vmax.f32 %v2066, 0.0
      %v2102 = vmax.f32 %v2072, 0.0
      %v2103 = vmax.f32 %v2078, 0.0
      %v2104 = vmax.f32 %v2084, 0.0
      %v2105 = vmax.f32 %v2090, 0.0
      %v2106 = vmax.f32 %v2096, 0.0
      %v2107 = vld [vmem:[%s5] sm:$0xff]
      %v2108 = vld [vmem:[%s5 + $0x8] sm:$0xff]
      %v2109 = vld [vmem:[%s5 + $0x10] sm:$0xff]
      %v2110 = vld [vmem:[%s6] sm:$0x1]
      %v2112 = vlaneseq
      %v2113 = vshrl.u32 %v2112, 7
      %v2114 = vsub.s32 0, %v2113
      %v2115 = vrot.slane %v2110, %v2114
      %vm2117 = vcmask 195584
      %v2119 = vsel %vm2117, %v2099, 0
      %v2122 = vsel %vm2117, %v2100, 0
      %v2125 = vsel %vm2117, %v2101, 0
      %v2128 = vsel %vm2117, %v2102, 0
      %v2131 = vsel %vm2117, %v2103, 0
      %v2134 = vsel %vm2117, %v2104, 0
      %v2137 = vsel %vm2117, %v2105, 0
      %v2140 = vsel %vm2117, %v2106, 0
      %2142 = vmatprep.subr.mxu0 0.0
      %v2143 = vand.u32 %v2107, 4294901760
      %2144 = vmatpush1.msra.mxu0 %v2143
      %2145 = vmatprep.subr.mxu0 0.0
      %v2146 = vand.u32 %v2108, 4294901760
      %2147 = vmatpush1.msra.mxu0 %v2146
      %2148 = vmatprep.subr.mxu0 0.0
      %v2149 = vand.u32 %v2109, 4294901760
      %2150 = vmatpush1.msra.mxu0 %v2149
      %2151 = vmatprep.subr.mxu0 0.0
      %2152 = vmatpush1.msra.mxu0 0.0
      %2153 = vmatprep.subr.mxu0 0.0
      %2154 = vmatpush1.msra.mxu0 0.0
      %2155 = vmatprep.subr.mxu0 0.0
      %2156 = vmatpush1.msra.mxu0 0.0
      %2157 = vmatprep.subr.mxu0 0.0
      %2158 = vmatpush1.msra.mxu0 0.0
      %2159 = vmatprep.subr.mxu0 0.0
      %2160 = vmatpush1.msra.mxu0 0.0
      %2161 = vmatprep.subr.mxu0 0.0
      %2162 = vmatpush1.msra.mxu0 0.0
      %2163 = vmatprep.subr.mxu0 0.0
      %2164 = vmatpush1.msra.mxu0 0.0
      %2165 = vmatprep.subr.mxu0 0.0
      %2166 = vmatpush1.msra.mxu0 0.0
      %2167 = vmatprep.subr.mxu0 0.0
      %2168 = vmatpush1.msra.mxu0 0.0
      %2169 = vmatprep.subr.mxu0 0.0
      %2170 = vmatpush1.msra.mxu0 0.0
      %2171 = vmatprep.subr.mxu0 0.0
      %2172 = vmatpush1.msra.mxu0 0.0
      %2173 = vmatprep.subr.mxu0 0.0
      %2174 = vmatpush1.msra.mxu0 0.0
      %2175 = vmatprep.subr.mxu0 0.0
      %2176 = vmatpush1.msra.mxu0 0.0
      %2177 = vmatprep.subr.mxu0 0.0
      %2178 = vmatpush1.msra.mxu0 0.0
      %2179 = vmatprep.subr.mxu0 0.0
      %2180 = vmatpush1.msra.mxu0 0.0
      %2181 = vmatprep.subr.mxu0 0.0
      %2182 = vmatpush1.msra.mxu0 0.0
      %2183 = vmatprep.subr.mxu0 0.0
      %2184 = vmatpush1.msra.mxu0 0.0
      %2185 = vmatprep.subr.mxu0 0.0
      %2186 = vmatpush1.msra.mxu0 0.0
      %2187 = vmatprep.subr.mxu0 0.0
      %2188 = vmatpush1.msra.mxu0 0.0
      %2189 = vmatprep.subr.mxu0 0.0
      %2190 = vmatpush1.msra.mxu0 0.0
      %2191 = vmatprep.subr.mxu0 0.0
      %2192 = vmatpush1.msra.mxu0 0.0
      %2193 = vmatprep.subr.mxu0 0.0
      %2194 = vmatpush1.msra.mxu0 0.0
      %2195 = vmatprep.subr.mxu0 0.0
      %2196 = vmatpush1.msra.mxu0 0.0
      %2197 = vmatprep.subr.mxu0 0.0
      %2198 = vmatpush1.msra.mxu0 0.0
      %2199 = vmatprep.subr.mxu0 0.0
      %2200 = vmatpush1.msra.mxu0 0.0
      %2201 = vmatprep.subr.mxu0 0.0
      %2202 = vmatpush1.msra.mxu0 0.0
      %2203 = vmatprep.subr.mxu0 0.0
      %2204 = vmatpush1.msra.mxu0 0.0
      %2205 = vmatprep.subr.mxu0 0.0
      %2206 = vmatpush1.msra.mxu0 0.0
      %2207 = vmatprep.subr.mxu0 0.0
      %2208 = vmatpush1.msra.mxu0 0.0
      %2209 = vmatprep.mubr.f32.mxu0 0.0
      %v2210 = vand.u32 %v2119, 4294901760
      %v2211 = vsub.f32 %v2119, %v2210
      %v2212 = vand.u32 %v2211, 4294901760
      %v2213 = vsub.f32 %v2211, %v2212
      %v2214 = vand.u32 %v2213, 4294901760
      %2215 = vmatmul.mubr.f32.gmra.mrb[0].mxu0 %v2214
      %v2216 = vpop.f32.mrb[0].mxu0
      %v2217 = vadd.f32 %v2115, %v2216
      %v2218 = vpop.f32.mrb[0].mxu0
      %2219 = vmatprep.mubr.f32.mxu0 0.0
      %v2220 = vand.u32 %v2122, 4294901760
      %v2221 = vsub.f32 %v2122, %v2220
      %v2222 = vand.u32 %v2221, 4294901760
      %v2223 = vsub.f32 %v2221, %v2222
      %v2224 = vand.u32 %v2223, 4294901760
      %2225 = vmatmul.mubr.f32.gmra.mrb[0].mxu0 %v2224
      %v2226 = vpop.f32.mrb[0].mxu0
      %v2227 = vadd.f32 %v2115, %v2226
      %v2228 = vpop.f32.mrb[0].mxu0
      %2229 = vmatprep.mubr.f32.mxu0 0.0
      %v2230 = vand.u32 %v2125, 4294901760
      %v2231 = vsub.f32 %v2125, %v2230
      %v2232 = vand.u32 %v2231, 4294901760
      %v2233 = vsub.f32 %v2231, %v2232
      %v2234 = vand.u32 %v2233, 4294901760
      %2235 = vmatmul.mubr.f32.gmra.mrb[0].mxu0 %v2234
      %v2236 = vpop.f32.mrb[0].mxu0
      %v2237 = vadd.f32 %v2115, %v2236
      %v2238 = vpop.f32.mrb[0].mxu0
      %2239 = vmatprep.mubr.f32.mxu0 0.0
      %v2240 = vand.u32 %v2128, 4294901760
      %v2241 = vsub.f32 %v2128, %v2240
      %v2242 = vand.u32 %v2241, 4294901760
      %v2243 = vsub.f32 %v2241, %v2242
      %v2244 = vand.u32 %v2243, 4294901760
      %2245 = vmatmul.mubr.f32.gmra.mrb[0].mxu0 %v2244
      %v2246 = vpop.f32.mrb[0].mxu0
      %v2247 = vadd.f32 %v2115, %v2246
      %v2248 = vpop.f32.mrb[0].mxu0
      %2249 = vmatprep.mubr.f32.mxu0 0.0
      %v2250 = vand.u32 %v2131, 4294901760
      %v2251 = vsub.f32 %v2131, %v2250
      %v2252 = vand.u32 %v2251, 4294901760
      %v2253 = vsub.f32 %v2251, %v2252
      %v2254 = vand.u32 %v2253, 4294901760
      %2255 = vmatmul.mubr.f32.gmra.mrb[0].mxu0 %v2254
      %v2256 = vpop.f32.mrb[0].mxu0
      %v2257 = vadd.f32 %v2115, %v2256
      %v2258 = vpop.f32.mrb[0].mxu0
      %2259 = vmatprep.mubr.f32.mxu0 0.0
      %v2260 = vand.u32 %v2134, 4294901760
      %v2261 = vsub.f32 %v2134, %v2260
      %v2262 = vand.u32 %v2261, 4294901760
      %v2263 = vsub.f32 %v2261, %v2262
      %v2264 = vand.u32 %v2263, 4294901760
      %2265 = vmatmul.mubr.f32.gmra.mrb[0].mxu0 %v2264
      %v2266 = vpop.f32.mrb[0].mxu0
      %v2267 = vadd.f32 %v2115, %v2266
      %v2268 = vpop.f32.mrb[0].mxu0
      %2269 = vmatprep.mubr.f32.mxu0 0.0
      %v2270 = vand.u32 %v2137, 4294901760
      %v2271 = vsub.f32 %v2137, %v2270
      %v2272 = vand.u32 %v2271, 4294901760
      %v2273 = vsub.f32 %v2271, %v2272
      %v2274 = vand.u32 %v2273, 4294901760
      %2275 = vmatmul.mubr.f32.gmra.mrb[0].mxu0 %v2274
      %v2276 = vpop.f32.mrb[0].mxu0
      %v2277 = vadd.f32 %v2115, %v2276
      %v2278 = vpop.f32.mrb[0].mxu0
      %2279 = vmatprep.mubr.f32.mxu0 0.0
      %v2280 = vand.u32 %v2140, 4294901760
      %v2281 = vsub.f32 %v2140, %v2280
      %v2282 = vand.u32 %v2281, 4294901760
      %v2283 = vsub.f32 %v2281, %v2282
      %v2284 = vand.u32 %v2283, 4294901760
      %2285 = vmatmul.mubr.f32.gmra.mrb[0].mxu0 %v2284
      %v2286 = vpop.f32.mrb[0].mxu0
      %v2287 = vadd.f32 %v2115, %v2286
      %v2288 = vpop.f32.mrb[0].mxu0
      %2289 = vdwg.mxu0
      %2290 = vmatprep.subr.mxu0 0.0
      %v2291 = vand.u32 %v2107, 4294901760
      %v2292 = vsub.f32 %v2107, %v2291
      %v2293 = vand.u32 %v2292, 4294901760
      %v2294 = vsub.f32 %v2292, %v2293
      %v2295 = vand.u32 %v2294, 4294901760
      %2296 = vmatpush1.msra.mxu0 %v2295
      %2297 = vmatprep.subr.mxu0 0.0
      %v2298 = vand.u32 %v2108, 4294901760
      %v2299 = vsub.f32 %v2108, %v2298
      %v2300 = vand.u32 %v2299, 4294901760
      %v2301 = vsub.f32 %v2299, %v2300
      %v2302 = vand.u32 %v2301, 4294901760
      %2303 = vmatpush1.msra.mxu0 %v2302
      %2304 = vmatprep.subr.mxu0 0.0
      %v2305 = vand.u32 %v2109, 4294901760
      %v2306 = vsub.f32 %v2109, %v2305
      %v2307 = vand.u32 %v2306, 4294901760
      %v2308 = vsub.f32 %v2306, %v2307
      %v2309 = vand.u32 %v2308, 4294901760
      %2310 = vmatpush1.msra.mxu0 %v2309
      %2311 = vmatprep.subr.mxu0 0.0
      %2312 = vmatpush1.msra.mxu0 0.0
      %2313 = vmatprep.subr.mxu0 0.0
      %2314 = vmatpush1.msra.mxu0 0.0
      %2315 = vmatprep.subr.mxu0 0.0
      %2316 = vmatpush1.msra.mxu0 0.0
      %2317 = vmatprep.subr.mxu0 0.0
      %2318 = vmatpush1.msra.mxu0 0.0
      %2319 = vmatprep.subr.mxu0 0.0
      %2320 = vmatpush1.msra.mxu0 0.0
      %2321 = vmatprep.subr.mxu0 0.0
      %2322 = vmatpush1.msra.mxu0 0.0
      %2323 = vmatprep.subr.mxu0 0.0
      %2324 = vmatpush1.msra.mxu0 0.0
      %2325 = vmatprep.subr.mxu0 0.0
      %2326 = vmatpush1.msra.mxu0 0.0
      %2327 = vmatprep.subr.mxu0 0.0
      %2328 = vmatpush1.msra.mxu0 0.0
      %2329 = vmatprep.subr.mxu0 0.0
      %2330 = vmatpush1.msra.mxu0 0.0
      %2331 = vmatprep.subr.mxu0 0.0
      %2332 = vmatpush1.msra.mxu0 0.0
      %2333 = vmatprep.subr.mxu0 0.0
      %2334 = vmatpush1.msra.mxu0 0.0
      %2335 = vmatprep.subr.mxu0 0.0
      %2336 = vmatpush1.msra.mxu0 0.0
      %2337 = vmatprep.subr.mxu0 0.0
      %2338 = vmatpush1.msra.mxu0 0.0
      %2339 = vmatprep.subr.mxu0 0.0
      %2340 = vmatpush1.msra.mxu0 0.0
      %2341 = vmatprep.subr.mxu0 0.0
      %2342 = vmatpush1.msra.mxu0 0.0
      %2343 = vmatprep.subr.mxu0 0.0
      %2344 = vmatpush1.msra.mxu0 0.0
      %2345 = vmatprep.subr.mxu0 0.0
      %2346 = vmatpush1.msra.mxu0 0.0
      %2347 = vmatprep.subr.mxu0 0.0
      %2348 = vmatpush1.msra.mxu0 0.0
      %2349 = vmatprep.subr.mxu0 0.0
      %2350 = vmatpush1.msra.mxu0 0.0
      %2351 = vmatprep.subr.mxu0 0.0
      %2352 = vmatpush1.msra.mxu0 0.0
      %2353 = vmatprep.subr.mxu0 0.0
      %2354 = vmatpush1.msra.mxu0 0.0
      %2355 = vmatprep.subr.mxu0 0.0
      %2356 = vmatpush1.msra.mxu0 0.0
      %2357 = vmatprep.subr.mxu0 0.0
      %2358 = vmatpush1.msra.mxu0 0.0
      %2359 = vmatprep.subr.mxu0 0.0
      %2360 = vmatpush1.msra.mxu0 0.0
      %2361 = vmatprep.subr.mxu0 0.0
      %2362 = vmatpush1.msra.mxu0 0.0
      %2363 = vmatprep.subr.mxu0 0.0
      %2364 = vmatpush1.msra.mxu0 0.0
      %2365 = vmatprep.subr.mxu0 0.0
      %2366 = vmatpush1.msra.mxu0 0.0
      %2367 = vmatprep.subr.mxu0 0.0
      %2368 = vmatpush1.msra.mxu0 0.0
      %2369 = vmatprep.mubr.f32.mxu0 0.0
      %v2370 = vand.u32 %v2119, 4294901760
      %2371 = vmatmul.mubr.f32.gmra.mrb[0].mxu0 %v2370
      %v2372 = vpop.f32.mrb[0].mxu0
      %v2373 = vadd.f32 %v2217, %v2372
      %v2374 = vpop.f32.mrb[0].mxu0
      %2375 = vmatprep.mubr.f32.mxu0 0.0
      %v2376 = vand.u32 %v2122, 4294901760
      %2377 = vmatmul.mubr.f32.gmra.mrb[0].mxu0 %v2376
      %v2378 = vpop.f32.mrb[0].mxu0
      %v2379 = vadd.f32 %v2227, %v2378
      %v2380 = vpop.f32.mrb[0].mxu0
      %2381 = vmatprep.mubr.f32.mxu0 0.0
      %v2382 = vand.u32 %v2125, 4294901760
      %2383 = vmatmul.mubr.f32.gmra.mrb[0].mxu0 %v2382
      %v2384 = vpop.f32.mrb[0].mxu0
      %v2385 = vadd.f32 %v2237, %v2384
      %v2386 = vpop.f32.mrb[0].mxu0
      %2387 = vmatprep.mubr.f32.mxu0 0.0
      %v2388 = vand.u32 %v2128, 4294901760
      %2389 = vmatmul.mubr.f32.gmra.mrb[0].mxu0 %v2388
      %v2390 = vpop.f32.mrb[0].mxu0
      %v2391 = vadd.f32 %v2247, %v2390
      %v2392 = vpop.f32.mrb[0].mxu0
      %2393 = vmatprep.mubr.f32.mxu0 0.0
      %v2394 = vand.u32 %v2131, 4294901760
      %2395 = vmatmul.mubr.f32.gmra.mrb[0].mxu0 %v2394
      %v2396 = vpop.f32.mrb[0].mxu0
      %v2397 = vadd.f32 %v2257, %v2396
      %v2398 = vpop.f32.mrb[0].mxu0
      %2399 = vmatprep.mubr.f32.mxu0 0.0
      %v2400 = vand.u32 %v2134, 4294901760
      %2401 = vmatmul.mubr.f32.gmra.mrb[0].mxu0 %v2400
      %v2402 = vpop.f32.mrb[0].mxu0
      %v2403 = vadd.f32 %v2267, %v2402
      %v2404 = vpop.f32.mrb[0].mxu0
      %2405 = vmatprep.mubr.f32.mxu0 0.0
      %v2406 = vand.u32 %v2137, 4294901760
      %2407 = vmatmul.mubr.f32.gmra.mrb[0].mxu0 %v2406
      %v2408 = vpop.f32.mrb[0].mxu0
      %v2409 = vadd.f32 %v2277, %v2408
      %v2410 = vpop.f32.mrb[0].mxu0
      %2411 = vmatprep.mubr.f32.mxu0 0.0
      %v2412 = vand.u32 %v2140, 4294901760
      %2413 = vmatmul.mubr.f32.gmra.mrb[0].mxu0 %v2412
      %v2414 = vpop.f32.mrb[0].mxu0
      %v2415 = vadd.f32 %v2287, %v2414
      %v2416 = vpop.f32.mrb[0].mxu0
      %2417 = vdwg.mxu0
      %2418 = vmatprep.subr.mxu0 0.0
      %v2419 = vand.u32 %v2107, 4294901760
      %v2420 = vsub.f32 %v2107, %v2419
      %2421 = vmatpush1.msra.mxu0 %v2420
      %2422 = vmatprep.subr.mxu0 0.0
      %v2423 = vand.u32 %v2108, 4294901760
      %v2424 = vsub.f32 %v2108, %v2423
      %2425 = vmatpush1.msra.mxu0 %v2424
      %2426 = vmatprep.subr.mxu0 0.0
      %v2427 = vand.u32 %v2109, 4294901760
      %v2428 = vsub.f32 %v2109, %v2427
      %2429 = vmatpush1.msra.mxu0 %v2428
      %2430 = vmatprep.subr.mxu0 0.0
      %2431 = vmatpush1.msra.mxu0 0.0
      %2432 = vmatprep.subr.mxu0 0.0
      %2433 = vmatpush1.msra.mxu0 0.0
      %2434 = vmatprep.subr.mxu0 0.0
      %2435 = vmatpush1.msra.mxu0 0.0
      %2436 = vmatprep.subr.mxu0 0.0
      %2437 = vmatpush1.msra.mxu0 0.0
      %2438 = vmatprep.subr.mxu0 0.0
      %2439 = vmatpush1.msra.mxu0 0.0
      %2440 = vmatprep.subr.mxu0 0.0
      %2441 = vmatpush1.msra.mxu0 0.0
      %2442 = vmatprep.subr.mxu0 0.0
      %2443 = vmatpush1.msra.mxu0 0.0
      %2444 = vmatprep.subr.mxu0 0.0
      %2445 = vmatpush1.msra.mxu0 0.0
      %2446 = vmatprep.subr.mxu0 0.0
      %2447 = vmatpush1.msra.mxu0 0.0
      %2448 = vmatprep.subr.mxu0 0.0
      %2449 = vmatpush1.msra.mxu0 0.0
      %2450 = vmatprep.subr.mxu0 0.0
      %2451 = vmatpush1.msra.mxu0 0.0
      %2452 = vmatprep.subr.mxu0 0.0
      %2453 = vmatpush1.msra.mxu0 0.0
      %2454 = vmatprep.subr.mxu0 0.0
      %2455 = vmatpush1.msra.mxu0 0.0
      %2456 = vmatprep.subr.mxu0 0.0
      %2457 = vmatpush1.msra.mxu0 0.0
      %2458 = vmatprep.subr.mxu0 0.0
      %2459 = vmatpush1.msra.mxu0 0.0
      %2460 = vmatprep.subr.mxu0 0.0
      %2461 = vmatpush1.msra.mxu0 0.0
      %2462 = vmatprep.subr.mxu0 0.0
      %2463 = vmatpush1.msra.mxu0 0.0
      %2464 = vmatprep.subr.mxu0 0.0
      %2465 = vmatpush1.msra.mxu0 0.0
      %2466 = vmatprep.subr.mxu0 0.0
      %2467 = vmatpush1.msra.mxu0 0.0
      %2468 = vmatprep.subr.mxu0 0.0
      %2469 = vmatpush1.msra.mxu0 0.0
      %2470 = vmatprep.subr.mxu0 0.0
      %2471 = vmatpush1.msra.mxu0 0.0
      %2472 = vmatprep.subr.mxu0 0.0
      %2473 = vmatpush1.msra.mxu0 0.0
      %2474 = vmatprep.subr.mxu0 0.0
      %2475 = vmatpush1.msra.mxu0 0.0
      %2476 = vmatprep.subr.mxu0 0.0
      %2477 = vmatpush1.msra.mxu0 0.0
      %2478 = vmatprep.subr.mxu0 0.0
      %2479 = vmatpush1.msra.mxu0 0.0
      %2480 = vmatprep.subr.mxu0 0.0
      %2481 = vmatpush1.msra.mxu0 0.0
      %2482 = vmatprep.subr.mxu0 0.0
      %2483 = vmatpush1.msra.mxu0 0.0
      %2484 = vmatprep.subr.mxu0 0.0
      %2485 = vmatpush1.msra.mxu0 0.0
      %2486 = vmatprep.subr.mxu0 0.0
      %2487 = vmatpush1.msra.mxu0 0.0
      %2488 = vmatprep.mubr.f32.mxu0 0.0
      %v2489 = vand.u32 %v2119, 4294901760
      %v2490 = vsub.f32 %v2119, %v2489
      %2491 = vmatmul.mubr.f32.gmra.mrb[0].mxu0 %v2490
      %v2492 = vpop.f32.mrb[0].mxu0
      %v2493 = vadd.f32 %v2373, %v2492
      %v2494 = vpop.f32.mrb[0].mxu0
      %2495 = vmatprep.mubr.f32.mxu0 0.0
      %v2496 = vand.u32 %v2122, 4294901760
      %v2497 = vsub.f32 %v2122, %v2496
      %2498 = vmatmul.mubr.f32.gmra.mrb[0].mxu0 %v2497
      %v2499 = vpop.f32.mrb[0].mxu0
      %v2500 = vadd.f32 %v2379, %v2499
      %v2501 = vpop.f32.mrb[0].mxu0
      %2502 = vmatprep.mubr.f32.mxu0 0.0
      %v2503 = vand.u32 %v2125, 4294901760
      %v2504 = vsub.f32 %v2125, %v2503
      %2505 = vmatmul.mubr.f32.gmra.mrb[0].mxu0 %v2504
      %v2506 = vpop.f32.mrb[0].mxu0
      %v2507 = vadd.f32 %v2385, %v2506
      %v2508 = vpop.f32.mrb[0].mxu0
      %2509 = vmatprep.mubr.f32.mxu0 0.0
      %v2510 = vand.u32 %v2128, 4294901760
      %v2511 = vsub.f32 %v2128, %v2510
      %2512 = vmatmul.mubr.f32.gmra.mrb[0].mxu0 %v2511
      %v2513 = vpop.f32.mrb[0].mxu0
      %v2514 = vadd.f32 %v2391, %v2513
      %v2515 = vpop.f32.mrb[0].mxu0
      %2516 = vmatprep.mubr.f32.mxu0 0.0
      %v2517 = vand.u32 %v2131, 4294901760
      %v2518 = vsub.f32 %v2131, %v2517
      %2519 = vmatmul.mubr.f32.gmra.mrb[0].mxu0 %v2518
      %v2520 = vpop.f32.mrb[0].mxu0
      %v2521 = vadd.f32 %v2397, %v2520
      %v2522 = vpop.f32.mrb[0].mxu0
      %2523 = vmatprep.mubr.f32.mxu0 0.0
      %v2524 = vand.u32 %v2134, 4294901760
      %v2525 = vsub.f32 %v2134, %v2524
      %2526 = vmatmul.mubr.f32.gmra.mrb[0].mxu0 %v2525
      %v2527 = vpop.f32.mrb[0].mxu0
      %v2528 = vadd.f32 %v2403, %v2527
      %v2529 = vpop.f32.mrb[0].mxu0
      %2530 = vmatprep.mubr.f32.mxu0 0.0
      %v2531 = vand.u32 %v2137, 4294901760
      %v2532 = vsub.f32 %v2137, %v2531
      %2533 = vmatmul.mubr.f32.gmra.mrb[0].mxu0 %v2532
      %v2534 = vpop.f32.mrb[0].mxu0
      %v2535 = vadd.f32 %v2409, %v2534
      %v2536 = vpop.f32.mrb[0].mxu0
      %2537 = vmatprep.mubr.f32.mxu0 0.0
      %v2538 = vand.u32 %v2140, 4294901760
      %v2539 = vsub.f32 %v2140, %v2538
      %2540 = vmatmul.mubr.f32.gmra.mrb[0].mxu0 %v2539
      %v2541 = vpop.f32.mrb[0].mxu0
      %v2542 = vadd.f32 %v2415, %v2541
      %v2543 = vpop.f32.mrb[0].mxu0
      %2544 = vdwg.mxu0
      %2545 = vmatprep.subr.mxu0 0.0
      %v2546 = vand.u32 %v2107, 4294901760
      %2547 = vmatpush1.msra.mxu0 %v2546
      %2548 = vmatprep.subr.mxu0 0.0
      %v2549 = vand.u32 %v2108, 4294901760
      %2550 = vmatpush1.msra.mxu0 %v2549
      %2551 = vmatprep.subr.mxu0 0.0
      %v2552 = vand.u32 %v2109, 4294901760
      %2553 = vmatpush1.msra.mxu0 %v2552
      %2554 = vmatprep.subr.mxu0 0.0
      %2555 = vmatpush1.msra.mxu0 0.0
      %2556 = vmatprep.subr.mxu0 0.0
      %2557 = vmatpush1.msra.mxu0 0.0
      %2558 = vmatprep.subr.mxu0 0.0
      %2559 = vmatpush1.msra.mxu0 0.0
      %2560 = vmatprep.subr.mxu0 0.0
      %2561 = vmatpush1.msra.mxu0 0.0
      %2562 = vmatprep.subr.mxu0 0.0
      %2563 = vmatpush1.msra.mxu0 0.0
      %2564 = vmatprep.subr.mxu0 0.0
      %2565 = vmatpush1.msra.mxu0 0.0
      %2566 = vmatprep.subr.mxu0 0.0
      %2567 = vmatpush1.msra.mxu0 0.0
      %2568 = vmatprep.subr.mxu0 0.0
      %2569 = vmatpush1.msra.mxu0 0.0
      %2570 = vmatprep.subr.mxu0 0.0
      %2571 = vmatpush1.msra.mxu0 0.0
      %2572 = vmatprep.subr.mxu0 0.0
      %2573 = vmatpush1.msra.mxu0 0.0
      %2574 = vmatprep.subr.mxu0 0.0
      %2575 = vmatpush1.msra.mxu0 0.0
      %2576 = vmatprep.subr.mxu0 0.0
      %2577 = vmatpush1.msra.mxu0 0.0
      %2578 = vmatprep.subr.mxu0 0.0
      %2579 = vmatpush1.msra.mxu0 0.0
      %2580 = vmatprep.subr.mxu0 0.0
      %2581 = vmatpush1.msra.mxu0 0.0
      %2582 = vmatprep.subr.mxu0 0.0
      %2583 = vmatpush1.msra.mxu0 0.0
      %2584 = vmatprep.subr.mxu0 0.0
      %2585 = vmatpush1.msra.mxu0 0.0
      %2586 = vmatprep.subr.mxu0 0.0
      %2587 = vmatpush1.msra.mxu0 0.0
      %2588 = vmatprep.subr.mxu0 0.0
      %2589 = vmatpush1.msra.mxu0 0.0
      %2590 = vmatprep.subr.mxu0 0.0
      %2591 = vmatpush1.msra.mxu0 0.0
      %2592 = vmatprep.subr.mxu0 0.0
      %2593 = vmatpush1.msra.mxu0 0.0
      %2594 = vmatprep.subr.mxu0 0.0
      %2595 = vmatpush1.msra.mxu0 0.0
      %2596 = vmatprep.subr.mxu0 0.0
      %2597 = vmatpush1.msra.mxu0 0.0
      %2598 = vmatprep.subr.mxu0 0.0
      %2599 = vmatpush1.msra.mxu0 0.0
      %2600 = vmatprep.subr.mxu0 0.0
      %2601 = vmatpush1.msra.mxu0 0.0
      %2602 = vmatprep.subr.mxu0 0.0
      %2603 = vmatpush1.msra.mxu0 0.0
      %2604 = vmatprep.subr.mxu0 0.0
      %2605 = vmatpush1.msra.mxu0 0.0
      %2606 = vmatprep.subr.mxu0 0.0
      %2607 = vmatpush1.msra.mxu0 0.0
      %2608 = vmatprep.subr.mxu0 0.0
      %2609 = vmatpush1.msra.mxu0 0.0
      %2610 = vmatprep.subr.mxu0 0.0
      %2611 = vmatpush1.msra.mxu0 0.0
      %2612 = vmatprep.mubr.f32.mxu0 0.0
      %v2613 = vand.u32 %v2119, 4294901760
      %v2614 = vsub.f32 %v2119, %v2613
      %v2615 = vand.u32 %v2614, 4294901760
      %2616 = vmatmul.mubr.f32.gmra.mrb[0].mxu0 %v2615
      %v2617 = vpop.f32.mrb[0].mxu0
      %v2618 = vadd.f32 %v2493, %v2617
      %v2619 = vpop.f32.mrb[0].mxu0
      %2620 = vmatprep.mubr.f32.mxu0 0.0
      %v2621 = vand.u32 %v2122, 4294901760
      %v2622 = vsub.f32 %v2122, %v2621
      %v2623 = vand.u32 %v2622, 4294901760
      %2624 = vmatmul.mubr.f32.gmra.mrb[0].mxu0 %v2623
      %v2625 = vpop.f32.mrb[0].mxu0
      %v2626 = vadd.f32 %v2500, %v2625
      %v2627 = vpop.f32.mrb[0].mxu0
      %2628 = vmatprep.mubr.f32.mxu0 0.0
      %v2629 = vand.u32 %v2125, 4294901760
      %v2630 = vsub.f32 %v2125, %v2629
      %v2631 = vand.u32 %v2630, 4294901760
      %2632 = vmatmul.mubr.f32.gmra.mrb[0].mxu0 %v2631
      %v2633 = vpop.f32.mrb[0].mxu0
      %v2634 = vadd.f32 %v2507, %v2633
      %v2635 = vpop.f32.mrb[0].mxu0
      %2636 = vmatprep.mubr.f32.mxu0 0.0
      %v2637 = vand.u32 %v2128, 4294901760
      %v2638 = vsub.f32 %v2128, %v2637
      %v2639 = vand.u32 %v2638, 4294901760
      %2640 = vmatmul.mubr.f32.gmra.mrb[0].mxu0 %v2639
      %v2641 = vpop.f32.mrb[0].mxu0
      %v2642 = vadd.f32 %v2514, %v2641
      %v2643 = vpop.f32.mrb[0].mxu0
      %2644 = vmatprep.mubr.f32.mxu0 0.0
      %v2645 = vand.u32 %v2131, 4294901760
      %v2646 = vsub.f32 %v2131, %v2645
      %v2647 = vand.u32 %v2646, 4294901760
      %2648 = vmatmul.mubr.f32.gmra.mrb[0].mxu0 %v2647
      %v2649 = vpop.f32.mrb[0].mxu0
      %v2650 = vadd.f32 %v2521, %v2649
      %v2651 = vpop.f32.mrb[0].mxu0
      %2652 = vmatprep.mubr.f32.mxu0 0.0
      %v2653 = vand.u32 %v2134, 4294901760
      %v2654 = vsub.f32 %v2134, %v2653
      %v2655 = vand.u32 %v2654, 4294901760
      %2656 = vmatmul.mubr.f32.gmra.mrb[0].mxu0 %v2655
      %v2657 = vpop.f32.mrb[0].mxu0
      %v2658 = vadd.f32 %v2528, %v2657
      %v2659 = vpop.f32.mrb[0].mxu0
      %2660 = vmatprep.mubr.f32.mxu0 0.0
      %v2661 = vand.u32 %v2137, 4294901760
      %v2662 = vsub.f32 %v2137, %v2661
      %v2663 = vand.u32 %v2662, 4294901760
      %2664 = vmatmul.mubr.f32.gmra.mrb[0].mxu0 %v2663
      %v2665 = vpop.f32.mrb[0].mxu0
      %v2666 = vadd.f32 %v2535, %v2665
      %v2667 = vpop.f32.mrb[0].mxu0
      %2668 = vmatprep.mubr.f32.mxu0 0.0
      %v2669 = vand.u32 %v2140, 4294901760
      %v2670 = vsub.f32 %v2140, %v2669
      %v2671 = vand.u32 %v2670, 4294901760
      %2672 = vmatmul.mubr.f32.gmra.mrb[0].mxu0 %v2671
      %v2673 = vpop.f32.mrb[0].mxu0
      %v2674 = vadd.f32 %v2542, %v2673
      %v2675 = vpop.f32.mrb[0].mxu0
      %2676 = vdwg.mxu0
      %2677 = vmatprep.subr.mxu0 0.0
      %v2678 = vand.u32 %v2107, 4294901760
      %v2679 = vsub.f32 %v2107, %v2678
      %v2680 = vand.u32 %v2679, 4294901760
      %2681 = vmatpush1.msra.mxu0 %v2680
      %2682 = vmatprep.subr.mxu0 0.0
      %v2683 = vand.u32 %v2108, 4294901760
      %v2684 = vsub.f32 %v2108, %v2683
      %v2685 = vand.u32 %v2684, 4294901760
      %2686 = vmatpush1.msra.mxu0 %v2685
      %2687 = vmatprep.subr.mxu0 0.0
      %v2688 = vand.u32 %v2109, 4294901760
      %v2689 = vsub.f32 %v2109, %v2688
      %v2690 = vand.u32 %v2689, 4294901760
      %2691 = vmatpush1.msra.mxu0 %v2690
      %2692 = vmatprep.subr.mxu0 0.0
      %2693 = vmatpush1.msra.mxu0 0.0
      %2694 = vmatprep.subr.mxu0 0.0
      %2695 = vmatpush1.msra.mxu0 0.0
      %2696 = vmatprep.subr.mxu0 0.0
      %2697 = vmatpush1.msra.mxu0 0.0
      %2698 = vmatprep.subr.mxu0 0.0
      %2699 = vmatpush1.msra.mxu0 0.0
      %2700 = vmatprep.subr.mxu0 0.0
      %2701 = vmatpush1.msra.mxu0 0.0
      %2702 = vmatprep.subr.mxu0 0.0
      %2703 = vmatpush1.msra.mxu0 0.0
      %2704 = vmatprep.subr.mxu0 0.0
      %2705 = vmatpush1.msra.mxu0 0.0
      %2706 = vmatprep.subr.mxu0 0.0
      %2707 = vmatpush1.msra.mxu0 0.0
      %2708 = vmatprep.subr.mxu0 0.0
      %2709 = vmatpush1.msra.mxu0 0.0
      %2710 = vmatprep.subr.mxu0 0.0
      %2711 = vmatpush1.msra.mxu0 0.0
      %2712 = vmatprep.subr.mxu0 0.0
      %2713 = vmatpush1.msra.mxu0 0.0
      %2714 = vmatprep.subr.mxu0 0.0
      %2715 = vmatpush1.msra.mxu0 0.0
      %2716 = vmatprep.subr.mxu0 0.0
      %2717 = vmatpush1.msra.mxu0 0.0
      %2718 = vmatprep.subr.mxu0 0.0
      %2719 = vmatpush1.msra.mxu0 0.0
      %2720 = vmatprep.subr.mxu0 0.0
      %2721 = vmatpush1.msra.mxu0 0.0
      %2722 = vmatprep.subr.mxu0 0.0
      %2723 = vmatpush1.msra.mxu0 0.0
      %2724 = vmatprep.subr.mxu0 0.0
      %2725 = vmatpush1.msra.mxu0 0.0
      %2726 = vmatprep.subr.mxu0 0.0
      %2727 = vmatpush1.msra.mxu0 0.0
      %2728 = vmatprep.subr.mxu0 0.0
      %2729 = vmatpush1.msra.mxu0 0.0
      %2730 = vmatprep.subr.mxu0 0.0
      %2731 = vmatpush1.msra.mxu0 0.0
      %2732 = vmatprep.subr.mxu0 0.0
      %2733 = vmatpush1.msra.mxu0 0.0
      %2734 = vmatprep.subr.mxu0 0.0
      %2735 = vmatpush1.msra.mxu0 0.0
      %2736 = vmatprep.subr.mxu0 0.0
      %2737 = vmatpush1.msra.mxu0 0.0
      %2738 = vmatprep.subr.mxu0 0.0
      %2739 = vmatpush1.msra.mxu0 0.0
      %2740 = vmatprep.subr.mxu0 0.0
      %2741 = vmatpush1.msra.mxu0 0.0
      %2742 = vmatprep.subr.mxu0 0.0
      %2743 = vmatpush1.msra.mxu0 0.0
      %2744 = vmatprep.subr.mxu0 0.0
      %2745 = vmatpush1.msra.mxu0 0.0
      %2746 = vmatprep.subr.mxu0 0.0
      %2747 = vmatpush1.msra.mxu0 0.0
      %2748 = vmatprep.subr.mxu0 0.0
      %2749 = vmatpush1.msra.mxu0 0.0
      %2750 = vmatprep.mubr.f32.mxu0 0.0
      %v2751 = vand.u32 %v2119, 4294901760
      %2752 = vmatmul.mubr.f32.gmra.mrb[0].mxu0 %v2751
      %v2753 = vpop.f32.mrb[0].mxu0
      %v2754 = vadd.f32 %v2618, %v2753
      %v2755 = vpop.f32.mrb[0].mxu0
      %2756 = vmatprep.mubr.f32.mxu0 0.0
      %v2757 = vand.u32 %v2122, 4294901760
      %2758 = vmatmul.mubr.f32.gmra.mrb[0].mxu0 %v2757
      %v2759 = vpop.f32.mrb[0].mxu0
      %v2760 = vadd.f32 %v2626, %v2759
      %v2761 = vpop.f32.mrb[0].mxu0
      %2762 = vmatprep.mubr.f32.mxu0 0.0
      %v2763 = vand.u32 %v2125, 4294901760
      %2764 = vmatmul.mubr.f32.gmra.mrb[0].mxu0 %v2763
      %v2765 = vpop.f32.mrb[0].mxu0
      %v2766 = vadd.f32 %v2634, %v2765
      %v2767 = vpop.f32.mrb[0].mxu0
      %2768 = vmatprep.mubr.f32.mxu0 0.0
      %v2769 = vand.u32 %v2128, 4294901760
      %2770 = vmatmul.mubr.f32.gmra.mrb[0].mxu0 %v2769
      %v2771 = vpop.f32.mrb[0].mxu0
      %v2772 = vadd.f32 %v2642, %v2771
      %v2773 = vpop.f32.mrb[0].mxu0
      %2774 = vmatprep.mubr.f32.mxu0 0.0
      %v2775 = vand.u32 %v2131, 4294901760
      %2776 = vmatmul.mubr.f32.gmra.mrb[0].mxu0 %v2775
      %v2777 = vpop.f32.mrb[0].mxu0
      %v2778 = vadd.f32 %v2650, %v2777
      %v2779 = vpop.f32.mrb[0].mxu0
      %2780 = vmatprep.mubr.f32.mxu0 0.0
      %v2781 = vand.u32 %v2134, 4294901760
      %2782 = vmatmul.mubr.f32.gmra.mrb[0].mxu0 %v2781
      %v2783 = vpop.f32.mrb[0].mxu0
      %v2784 = vadd.f32 %v2658, %v2783
      %v2785 = vpop.f32.mrb[0].mxu0
      %2786 = vmatprep.mubr.f32.mxu0 0.0
      %v2787 = vand.u32 %v2137, 4294901760
      %2788 = vmatmul.mubr.f32.gmra.mrb[0].mxu0 %v2787
      %v2789 = vpop.f32.mrb[0].mxu0
      %v2790 = vadd.f32 %v2666, %v2789
      %v2791 = vpop.f32.mrb[0].mxu0
      %2792 = vmatprep.mubr.f32.mxu0 0.0
      %v2793 = vand.u32 %v2140, 4294901760
      %2794 = vmatmul.mubr.f32.gmra.mrb[0].mxu0 %v2793
      %v2795 = vpop.f32.mrb[0].mxu0
      %v2796 = vadd.f32 %v2674, %v2795
      %v2797 = vpop.f32.mrb[0].mxu0
      %2798 = vdwg.mxu0
      %2799 = vmatprep.subr.mxu0 0.0
      %v2800 = vand.u32 %v2107, 4294901760
      %2801 = vmatpush1.msra.mxu0 %v2800
      %2802 = vmatprep.subr.mxu0 0.0
      %v2803 = vand.u32 %v2108, 4294901760
      %2804 = vmatpush1.msra.mxu0 %v2803
      %2805 = vmatprep.subr.mxu0 0.0
      %v2806 = vand.u32 %v2109, 4294901760
      %2807 = vmatpush1.msra.mxu0 %v2806
      %2808 = vmatprep.subr.mxu0 0.0
      %2809 = vmatpush1.msra.mxu0 0.0
      %2810 = vmatprep.subr.mxu0 0.0
      %2811 = vmatpush1.msra.mxu0 0.0
      %2812 = vmatprep.subr.mxu0 0.0
      %2813 = vmatpush1.msra.mxu0 0.0
      %2814 = vmatprep.subr.mxu0 0.0
      %2815 = vmatpush1.msra.mxu0 0.0
      %2816 = vmatprep.subr.mxu0 0.0
      %2817 = vmatpush1.msra.mxu0 0.0
      %2818 = vmatprep.subr.mxu0 0.0
      %2819 = vmatpush1.msra.mxu0 0.0
      %2820 = vmatprep.subr.mxu0 0.0
      %2821 = vmatpush1.msra.mxu0 0.0
      %2822 = vmatprep.subr.mxu0 0.0
      %2823 = vmatpush1.msra.mxu0 0.0
      %2824 = vmatprep.subr.mxu0 0.0
      %2825 = vmatpush1.msra.mxu0 0.0
      %2826 = vmatprep.subr.mxu0 0.0
      %2827 = vmatpush1.msra.mxu0 0.0
      %2828 = vmatprep.subr.mxu0 0.0
      %2829 = vmatpush1.msra.mxu0 0.0
      %2830 = vmatprep.subr.mxu0 0.0
      %2831 = vmatpush1.msra.mxu0 0.0
      %2832 = vmatprep.subr.mxu0 0.0
      %2833 = vmatpush1.msra.mxu0 0.0
      %2834 = vmatprep.subr.mxu0 0.0
      %2835 = vmatpush1.msra.mxu0 0.0
      %2836 = vmatprep.subr.mxu0 0.0
      %2837 = vmatpush1.msra.mxu0 0.0
      %2838 = vmatprep.subr.mxu0 0.0
      %2839 = vmatpush1.msra.mxu0 0.0
      %2840 = vmatprep.subr.mxu0 0.0
      %2841 = vmatpush1.msra.mxu0 0.0
      %2842 = vmatprep.subr.mxu0 0.0
      %2843 = vmatpush1.msra.mxu0 0.0
      %2844 = vmatprep.subr.mxu0 0.0
      %2845 = vmatpush1.msra.mxu0 0.0
      %2846 = vmatprep.subr.mxu0 0.0
      %2847 = vmatpush1.msra.mxu0 0.0
      %2848 = vmatprep.subr.mxu0 0.0
      %2849 = vmatpush1.msra.mxu0 0.0
      %2850 = vmatprep.subr.mxu0 0.0
      %2851 = vmatpush1.msra.mxu0 0.0
      %2852 = vmatprep.subr.mxu0 0.0
      %2853 = vmatpush1.msra.mxu0 0.0
      %2854 = vmatprep.subr.mxu0 0.0
      %2855 = vmatpush1.msra.mxu0 0.0
      %2856 = vmatprep.subr.mxu0 0.0
      %2857 = vmatpush1.msra.mxu0 0.0
      %2858 = vmatprep.subr.mxu0 0.0
      %2859 = vmatpush1.msra.mxu0 0.0
      %2860 = vmatprep.subr.mxu0 0.0
      %2861 = vmatpush1.msra.mxu0 0.0
      %2862 = vmatprep.subr.mxu0 0.0
      %2863 = vmatpush1.msra.mxu0 0.0
      %2864 = vmatprep.subr.mxu0 0.0
      %2865 = vmatpush1.msra.mxu0 0.0
      %2866 = vmatprep.mubr.f32.mxu0 0.0
      %v2867 = vand.u32 %v2119, 4294901760
      %2868 = vmatmul.mubr.f32.gmra.mrb[0].mxu0 %v2867
      %v2869 = vpop.f32.mrb[0].mxu0
      %v2870 = vadd.f32 %v2754, %v2869
      %v2871 = vpop.f32.mrb[0].mxu0
      %2872 = vmatprep.mubr.f32.mxu0 0.0
      %v2873 = vand.u32 %v2122, 4294901760
      %2874 = vmatmul.mubr.f32.gmra.mrb[0].mxu0 %v2873
      %v2875 = vpop.f32.mrb[0].mxu0
      %v2876 = vadd.f32 %v2760, %v2875
      %v2877 = vpop.f32.mrb[0].mxu0
      %2878 = vmatprep.mubr.f32.mxu0 0.0
      %v2879 = vand.u32 %v2125, 4294901760
      %2880 = vmatmul.mubr.f32.gmra.mrb[0].mxu0 %v2879
      %v2881 = vpop.f32.mrb[0].mxu0
      %v2882 = vadd.f32 %v2766, %v2881
      %v2883 = vpop.f32.mrb[0].mxu0
      %2884 = vmatprep.mubr.f32.mxu0 0.0
      %v2885 = vand.u32 %v2128, 4294901760
      %2886 = vmatmul.mubr.f32.gmra.mrb[0].mxu0 %v2885
      %v2887 = vpop.f32.mrb[0].mxu0
      %v2888 = vadd.f32 %v2772, %v2887
      %v2889 = vpop.f32.mrb[0].mxu0
      %2890 = vmatprep.mubr.f32.mxu0 0.0
      %v2891 = vand.u32 %v2131, 4294901760
      %2892 = vmatmul.mubr.f32.gmra.mrb[0].mxu0 %v2891
      %v2893 = vpop.f32.mrb[0].mxu0
      %v2894 = vadd.f32 %v2778, %v2893
      %v2895 = vpop.f32.mrb[0].mxu0
      %2896 = vmatprep.mubr.f32.mxu0 0.0
      %v2897 = vand.u32 %v2134, 4294901760
      %2898 = vmatmul.mubr.f32.gmra.mrb[0].mxu0 %v2897
      %v2899 = vpop.f32.mrb[0].mxu0
      %v2900 = vadd.f32 %v2784, %v2899
      %v2901 = vpop.f32.mrb[0].mxu0
      %2902 = vmatprep.mubr.f32.mxu0 0.0
      %v2903 = vand.u32 %v2137, 4294901760
      %2904 = vmatmul.mubr.f32.gmra.mrb[0].mxu0 %v2903
      %v2905 = vpop.f32.mrb[0].mxu0
      %v2906 = vadd.f32 %v2790, %v2905
      %v2907 = vpop.f32.mrb[0].mxu0
      %2908 = vmatprep.mubr.f32.mxu0 0.0
      %v2909 = vand.u32 %v2140, 4294901760
      %2910 = vmatmul.mubr.f32.gmra.mrb[0].mxu0 %v2909
      %v2911 = vpop.f32.mrb[0].mxu0
      %v2912 = vadd.f32 %v2796, %v2911
      %v2913 = vpop.f32.mrb[0].mxu0
      %2914 = vdwg.mxu0
      %v2915 = vmul.f32 %v2870, 0.5
      %v2916 = vmul.f32 %v2876, 0.5
      %v2917 = vmul.f32 %v2882, 0.5
      %v2918 = vmul.f32 %v2888, 0.5
      %v2919 = vmul.f32 %v2894, 0.5
      %v2920 = vmul.f32 %v2900, 0.5
      %v2921 = vmul.f32 %v2906, 0.5
      %v2922 = vmul.f32 %v2912, 0.5
      %v2923 = vtanh.pop %v2915
      %v2924 = vtanh.pop %v2916
      %v2925 = vtanh.pop %v2917
      %v2926 = vtanh.pop %v2918
      %v2927 = vtanh.pop %v2919
      %v2928 = vtanh.pop %v2920
      %v2929 = vtanh.pop %v2921
      %v2930 = vtanh.pop %v2922
      %v2931 = vmul.f32 %v2923, 0.5
      %v2932 = vmul.f32 %v2924, 0.5
      %v2933 = vmul.f32 %v2925, 0.5
      %v2934 = vmul.f32 %v2926, 0.5
      %v2935 = vmul.f32 %v2927, 0.5
      %v2936 = vmul.f32 %v2928, 0.5
      %v2937 = vmul.f32 %v2929, 0.5
      %v2938 = vmul.f32 %v2930, 0.5
      %v2939 = vadd.f32 %v2931, 0.5
      %v2940 = vadd.f32 %v2932, 0.5
      %v2941 = vadd.f32 %v2933, 0.5
      %v2942 = vadd.f32 %v2934, 0.5
      %v2943 = vadd.f32 %v2935, 0.5
      %v2944 = vadd.f32 %v2936, 0.5
      %v2945 = vadd.f32 %v2937, 0.5
      %v2946 = vadd.f32 %v2938, 0.5
      %vm2947 = vcmask 64512
      %2948 = vst.msk [vmem:[%s280] sm:$0xff] %vm2947, %v2939
      %2949 = vst.msk [vmem:[%s280 + $0x8] sm:$0xff] %vm2947, %v2940
      %2950 = vst.msk [vmem:[%s280 + $0x10] sm:$0xff] %vm2947, %v2941
      %2951 = vst.msk [vmem:[%s280 + $0x18] sm:$0xff] %vm2947, %v2942
      %2952 = vst.msk [vmem:[%s280 + $0x20] sm:$0xff] %vm2947, %v2943
      %2953 = vst.msk [vmem:[%s280 + $0x28] sm:$0xff] %vm2947, %v2944
      %2954 = vst.msk [vmem:[%s280 + $0x30] sm:$0xff] %vm2947, %v2945
      %2955 = vst.msk [vmem:[%s280 + $0x38] sm:$0xff] %vm2947, %v2946
      %s2956 = smul.u32 8, %s18
      %p2957 = scmp.lt.s32.totalorder %s2956, 15
      %s2958 = scalar_select %p2957, %s2956, 15
      %s2959 = smul.addr %s2958, 8
      %s2960 = scalar_lea.vmem %s7, %s2959
      // Predicated region
      $region49: #{tpu_custom_call.1} parent=47 // pred_check
        %p2961 = pneg %p188
      $region50: #{tpu_custom_call.1} parent=47 // pred_check_branch
        %2963 = sbr.rel (%p2961) target = $region52
      $region51: #{tpu_custom_call.1} parent=47 // pred_region
        %s2964 = smul.u32 8, %s18
      $region52: #{tpu_custom_call.1} parent=47 // pred_fallthru
        _
    $region48: #{tpu_custom_call.1} parent=5 // pred_fallthru
      _
    %p2965 = scmp.le.s32.totalorder 2, %s13
    // Predicated region
    $region53: #{tpu_custom_call.1} parent=5 // pred_check
      %p2966 = pneg %p2965
    $region54: #{tpu_custom_call.1} parent=5 // pred_check_branch
      %2968 = sbr.rel (%p2966) target = $region56
    $region55: #{tpu_custom_call.1} parent=5 // pred_region
      %s2969 = ssub.s32 %s13, 2
      // Predicated region
      $region57: #{tpu_custom_call.1} parent=55 // pred_check
        %p2970 = pneg %p194
      $region58: #{tpu_custom_call.1} parent=55 // pred_check_branch
        %2972 = sbr.rel (%p2970) target = $region60
      $region59: #{tpu_custom_call.1} parent=55 // pred_region
        %s2973 = smul.u32 8, %s19
        %p2974 = scmp.lt.s32.totalorder %s2973, 15
        %s2975 = scalar_select %p2974, %s2973, 15
        %s2976 = smul.addr %s2975, 8
        %s2977 = scalar_lea.vmem %s7, %s2976
      $region60: #{tpu_custom_call.1} parent=55 // pred_fallthru
        _
    $region56: #{tpu_custom_call.1} parent=5 // pred_fallthru
      _
  $region6: #{tpu_custom_call.1} parent=0 // loop_footer
    %s17 = sadd.s32 1, %s13
  $region7: #{tpu_custom_call.1} parent=0 // loop_footer_branch
    %12 = sbr.rel target = $region3
  $region8: #{tpu_custom_call.1} parent=0 // loop_exit
    _

</llo_original>
